<compile_context>
chip_gen: v7x
topology: tpu7x:2x2x1
jax: 0.10.0
libtpu: 0.0.40
codegen_flags: <defaults>
</compile_context>

<pallas_src>
import functools

import jax
import jax.numpy as jnp
from jax.experimental import pallas as pl
from jax.experimental.pallas import tpu as pltpu


def _round_up(x, m):
    return ((x + m - 1) // m) * m


def mos_kernel(wav_ref, w_pt_ref, consts_ref, out_ref, acc_ref):
    """Grid = (batch_tiles, d_tiles, k_tiles). K is a reduction over T (samples)."""
    k = pl.program_id(2)

    @pl.when(k == 0)
    def _():
        acc_ref[...] = jnp.zeros_like(acc_ref)

    # Backbone matmul tile on the MXU, bf16 inputs with f32 accumulation:
    # (bm, tk) @ (tk, td) -> (bm, td)
    acc_ref[...] += jnp.dot(
        wav_ref[...], w_pt_ref[...], preferred_element_type=jnp.float32
    )

    @pl.when(k == pl.num_programs(2) - 1)
    def _():
        consts = consts_ref[...]                 # (2, td) f32: row0 = b_pt, row1 = w_mos
        b_pt = consts[0:1, :]
        w_mos_row = consts[1:2, :]
        # Epilogue: bias + tanh applied once to the accumulated sum (f32).
        emb = jnp.tanh(acc_ref[...] + b_pt)      # (bm, td)
        # mos_layer (out_features=1) restricted to this D tile: VPU multiply +
        # lane reduction; partial sums over D tiles are combined in the wrapper.
        head = jnp.sum(emb * w_mos_row, axis=-1, keepdims=True)   # (bm, 1)
        out_ref[...] = head[None]                # (1, bm, 1)


def prepare_params(w_pt, b_pt, w_mos, b_mos, *, tk=1024):
    """One-time (model-init) parameter prep, hoisted out of the per-call path:
    bf16 cast + K padding of the backbone weight, and folding the two (1, D)
    epilogue constants into a single (2, D) f32 array."""
    T, D = w_pt.shape
    T_pad = _round_up(T, tk)
    w_pt_p = jnp.zeros((T_pad, D), jnp.bfloat16).at[:T, :].set(
        w_pt.astype(jnp.bfloat16))
    consts = jnp.stack(
        [jnp.reshape(b_pt, (D,)).astype(jnp.float32),
         jnp.reshape(w_mos, (D,)).astype(jnp.float32)], axis=0)          # (2, D)
    b_mos_sc = jnp.reshape(b_mos, (1, 1)).astype(jnp.float32)
    return w_pt_p, consts, b_mos_sc


@functools.partial(jax.jit, static_argnames=("tk", "bm_cap"))
def mos_predictor(wav, w_pt_p, consts, b_mos, *, tk=1024, bm_cap=256):
    """wav: (B, T) f32; w_pt_p: (T_pad, D) bf16 (from prepare_params); consts: (2, D) f32;
    b_mos: (1, 1) f32. Returns (B, 1) f32."""
    B, T = wav.shape
    T_pad, D = w_pt_p.shape

    # Batch tile: >= 16 (bf16 sublane packing), <= bm_cap (256 -> full MXU M on v6e/v7x).
    # w_pt is re-read once per batch tile, so nb == 1 whenever B <= bm_cap.
    bm = min(_round_up(B, 16), bm_cap)
    B_pad = _round_up(B, bm)
    nb = B_pad // bm

    # Parallel D split (2 x D/2 columns) so v7x's second TensorCore has work even when
    # nb == 1; total w_pt traffic is unchanged (each tile streams half the columns).
    nd = 2 if (D % 256 == 0) else 1
    td = D // nd

    nk = T_pad // tk

    # Zero-padded rows / samples contribute nothing to the accumulated sum -> exact.
    wav_p = jnp.zeros((B_pad, T_pad), jnp.bfloat16).at[:B, :T].set(
        wav.astype(jnp.bfloat16))

    # VMEM budget for the chosen tiles (double-buffered streams) + generous headroom;
    # even the max configuration (bm=256, tk=1024/2048) stays far below v7x's 64 MiB.
    vmem_limit = int(
        2 * (bm * tk * 2)        # wav tiles (bf16, 2 buffers)
        + 2 * (tk * td * 2)      # w_pt tiles (bf16, 2 buffers)
        + 2 * (2 * td * 4)       # consts (f32, 2 buffers)
        + 2 * (bm * 4)           # output tile buffers
        + bm * td * 4            # f32 accumulator scratch
    ) + (32 << 20)

    cost = pl.CostEstimate(
        flops=2 * B_pad * T_pad * D + 4 * B_pad * D,
        transcendentals=B_pad * D,
        bytes_accessed=(nd * B_pad * T_pad * 2      # wav, re-read per D tile
                        + nb * T_pad * D * 2        # w_pt, re-read per batch tile
                        + 2 * D * 4                 # consts
                        + nd * B_pad * 4),          # partial outputs
    )

    out_parts = pl.pallas_call(
        mos_kernel,
        out_shape=jax.ShapeDtypeStruct((nd, B_pad, 1), jnp.float32),
        grid_spec=pltpu.PrefetchScalarGridSpec(
            num_scalar_prefetch=0,
            grid=(nb, nd, nk),
            in_specs=[
                pl.BlockSpec((bm, tk), lambda b, d, k: (b, k)),   # wav  (bf16 stream)
                pl.BlockSpec((tk, td), lambda b, d, k: (k, d)),   # w_pt (bf16 stream)
                pl.BlockSpec((2, td), lambda b, d, k: (0, d)),    # b_pt + w_mos (f32)
            ],
            out_specs=pl.BlockSpec((1, bm, 1), lambda b, d, k: (d, b, 0)),
            scratch_shapes=[pltpu.VMEM((bm, td), jnp.float32)],   # pre-tanh accumulator
        ),
        compiler_params=pltpu.CompilerParams(
            dimension_semantics=("parallel", "parallel", "arbitrary"),
            vmem_limit_bytes=vmem_limit,
        ),
        cost_estimate=cost,
    )(wav_p, w_pt_p, consts)

    # Combine the per-D-tile partial head sums (tiny) and add the mos_layer bias.
    return jnp.sum(out_parts, axis=0)[:B] + b_mos


def mos_predictor_ref(wav, w_pt, b_pt, w_mos, b_mos):
    """Pure-JAX reference, using the same bf16-quantized operands as the kernel.
    TODO(synk): validate the bf16 weight stream against the real f32 pretrained model."""
    wav_f = wav.astype(jnp.bfloat16).astype(jnp.float32)
    w_pt_f = w_pt.astype(jnp.bfloat16).astype(jnp.float32)
    emb = jnp.tanh(wav_f @ w_pt_f + jnp.reshape(b_pt, (1, -1)))
    return emb @ jnp.reshape(w_mos, (-1, 1)) + jnp.reshape(b_mos, (1, 1))


if __name__ == "__main__":
    B = 2           # batch (padded to 16 sublanes inside the wrapper)
    T = 2048        # waveform samples (small, synthetic) -> 2 K-tiles at tk=1024
    EMB_DIM = 768   # emb_dim from MosPredictor.__init__

    key = jax.random.PRNGKey(0)
    k_wav, k_wpt, k_bpt, k_wmos, k_bmos = jax.random.split(key, 5)

    wav = jax.random.normal(k_wav, (B, T), dtype=jnp.float32)

    # Deterministic synthetic parameters (shapes implied by the module).
    w_pt = jax.random.normal(k_wpt, (T, EMB_DIM), dtype=jnp.float32) * (1.0 / T ** 0.5)
    b_pt = jax.random.normal(k_bpt, (EMB_DIM,), dtype=jnp.float32) * 0.01
    # nn.Linear(emb_dim, 1): weight (1, emb_dim) stored transposed as (emb_dim, 1).
    w_mos = jax.random.normal(k_wmos, (EMB_DIM, 1), dtype=jnp.float32) * (1.0 / EMB_DIM ** 0.5)
    b_mos = jax.random.normal(k_bmos, (1,), dtype=jnp.float32) * 0.01

    # One-time weight prep (cast/pad/fold) hoisted out of the per-call path.
    w_pt_p, consts, b_mos_sc = prepare_params(w_pt, b_pt, w_mos, b_mos, tk=1024)

    out = mos_predictor(wav, w_pt_p, consts, b_mos_sc, tk=1024, bm_cap=256)
    out = jax.block_until_ready(out)

    ref = mos_predictor_ref(wav, w_pt, b_pt, w_mos, b_mos)
    assert out.shape == (B, 1), out.shape
    assert jnp.allclose(out, ref, atol=2e-3, rtol=2e-3), (out, ref)

    print("KERNEL_OK")
</pallas_src>

<mosaic_0001>
module attributes {stable_mosaic.version = 11 : i64} {
  func.func @mos_kernel(%arg0: i32, %arg1: i32, %arg2: i32, %arg3: memref<16x1024xbf16, #tpu.memory_space<vmem>>, %arg4: memref<1024x384xbf16, #tpu.memory_space<vmem>>, %arg5: memref<2x384xf32, #tpu.memory_space<vmem>>, %arg6: memref<1x16x1xf32, #tpu.memory_space<vmem>>, %arg7: memref<16x384xf32, #tpu.memory_space<vmem>>) attributes {dimension_semantics = [#tpu.dimension_semantics<parallel>, #tpu.dimension_semantics<parallel>, #tpu.dimension_semantics<arbitrary>], iteration_bounds = array<i64: 1, 2, 2>, scalar_prefetch = 0 : i64, scratch_operands = 1 : i64, tpu.core_type = #tpu.core_type<tc>, window_params = [{transform_indices = @transform_0, window_bounds = array<i64: 16, 1024>}, {transform_indices = @transform_1, window_bounds = array<i64: 1024, 384>}, {transform_indices = @transform_2, window_bounds = array<i64: 2, 384>}, {transform_indices = @transform_3, window_bounds = array<i64: 1, 16, 1>}]} {
    %c0_i32 = arith.constant 0 : i32
    %0 = arith.cmpi eq, %arg2, %c0_i32 : i32
    %1 = arith.extui %0 : i1 to i32
    %c0_i32_0 = arith.constant 0 : i32
    %2 = arith.cmpi ne, %1, %c0_i32_0 : i32
    scf.if %2 {
      %cst_9 = arith.constant 0.000000e+00 : f32
      %12 = vector.broadcast %cst_9 : f32 to vector<16x384xf32>
      %c0_10 = arith.constant 0 : index
      %c0_11 = arith.constant 0 : index
      %13 = vector.load %arg7[%c0_10, %c0_11] : memref<16x384xf32, #tpu.memory_space<vmem>>, vector<16x384xf32>
      tpu.vector_store %arg7[%c0_10, %c0_11], %12 {strides = array<i32>} : memref<16x384xf32, #tpu.memory_space<vmem>>, vector<16x384xf32>,
    } else {
    }
    %c0 = arith.constant 0 : index
    %c0_1 = arith.constant 0 : index
    %3 = vector.load %arg7[%c0, %c0_1] : memref<16x384xf32, #tpu.memory_space<vmem>>, vector<16x384xf32>
    %c0_2 = arith.constant 0 : index
    %c0_3 = arith.constant 0 : index
    %4 = vector.load %arg3[%c0_2, %c0_3] : memref<16x1024xbf16, #tpu.memory_space<vmem>>, vector<16x1024xbf16>
    %c0_4 = arith.constant 0 : index
    %c0_5 = arith.constant 0 : index
    %5 = vector.load %arg4[%c0_4, %c0_5] : memref<1024x384xbf16, #tpu.memory_space<vmem>>, vector<1024x384xbf16>
    %cst = arith.constant dense<0.000000e+00> : vector<16x384xf32>
    %6 = tpu.matmul %4, %5, %cst {dimension_numbers = #tpu.dot_dimension_numbers<[1], [0], [0], [1], [0, 0, 1, 1], [], []>} : vector<16x1024xbf16>, vector<1024x384xbf16>, vector<16x384xf32> -> vector<16x384xf32>
    %7 = arith.addf %3, %6 : vector<16x384xf32>
    %c0_6 = arith.constant 0 : index
    %c0_7 = arith.constant 0 : index
    %8 = vector.load %arg7[%c0_6, %c0_7] : memref<16x384xf32, #tpu.memory_space<vmem>>, vector<16x384xf32>
    tpu.vector_store %arg7[%c0_6, %c0_7], %7 {strides = array<i32>} : memref<16x384xf32, #tpu.memory_space<vmem>>, vector<16x384xf32>,
    %c1_i32 = arith.constant 1 : i32
    %9 = arith.cmpi eq, %arg2, %c1_i32 : i32
    %10 = arith.extui %9 : i1 to i32
    %c0_i32_8 = arith.constant 0 : i32
    %11 = arith.cmpi ne, %10, %c0_i32_8 : i32
    scf.if %11 {
      %c0_9 = arith.constant 0 : index
      %c0_10 = arith.constant 0 : index
      %12 = vector.load %arg5[%c0_9, %c0_10] : memref<2x384xf32, #tpu.memory_space<vmem>>, vector<2x384xf32>
      %13 = vector.extract_strided_slice %12 {offsets = [0, 0], sizes = [1, 384], strides = [1, 1]} : vector<2x384xf32> to vector<1x384xf32>
      %14 = vector.extract_strided_slice %12 {offsets = [1, 0], sizes = [1, 384], strides = [1, 1]} : vector<2x384xf32> to vector<1x384xf32>
      %c0_11 = arith.constant 0 : index
      %c0_12 = arith.constant 0 : index
      %15 = vector.load %arg7[%c0_11, %c0_12] : memref<16x384xf32, #tpu.memory_space<vmem>>, vector<16x384xf32>
      %16 = vector.broadcast %13 : vector<1x384xf32> to vector<16x384xf32>
      %17 = arith.addf %15, %16 : vector<16x384xf32>
      %18 = math.tanh %17 : vector<16x384xf32>
      %19 = vector.broadcast %14 : vector<1x384xf32> to vector<16x384xf32>
      %20 = arith.mulf %18, %19 : vector<16x384xf32>
      %cst_13 = arith.constant dense<0.000000e+00> : vector<16xf32>
      %21 = vector.multi_reduction <add>, %20, %cst_13 [1] : vector<16x384xf32> to vector<16xf32>
      %22 = vector.shape_cast %21 : vector<16xf32> to vector<16x1xf32>
      %23 = vector.shape_cast %22 : vector<16x1xf32> to vector<1x16x1xf32>
      %c0_14 = arith.constant 0 : index
      %c0_15 = arith.constant 0 : index
      %c0_16 = arith.constant 0 : index
      %24 = vector.load %arg6[%c0_14, %c0_15, %c0_16] : memref<1x16x1xf32, #tpu.memory_space<vmem>>, vector<1x16x1xf32>
      tpu.vector_store %arg6[%c0_14, %c0_15, %c0_16], %23 {strides = array<i32>} : memref<1x16x1xf32, #tpu.memory_space<vmem>>, vector<1x16x1xf32>,
    } else {
    }
    return
  }
  func.func @transform_0(%arg0: i32, %arg1: i32, %arg2: i32) -> (i32, i32) {
    %c0_i32 = arith.constant 0 : i32
    return %arg0, %arg2 : i32, i32
  }
  func.func @transform_1(%arg0: i32, %arg1: i32, %arg2: i32) -> (i32, i32) {
    %c0_i32 = arith.constant 0 : i32
    return %arg2, %arg1 : i32, i32
  }
  func.func @transform_2(%arg0: i32, %arg1: i32, %arg2: i32) -> (i32, i32) {
    %c0_i32 = arith.constant 0 : i32
    %c0_i32_0 = arith.constant 0 : i32
    return %c0_i32, %arg1 : i32, i32
  }
  func.func @transform_3(%arg0: i32, %arg1: i32, %arg2: i32) -> (i32, i32, i32) {
    %c0_i32 = arith.constant 0 : i32
    %c0_i32_0 = arith.constant 0 : i32
    return %arg1, %arg0, %c0_i32 : i32, i32, i32
  }
}

</mosaic_0001>

<llo_original>
// kernel: mos_predictor.1
$region0: #{mos_predictor.1}
  #allocation0 [shape = 'u32[]', space=smem, size = 0x4, offset = 0x4, fixed_abs, tag = 'smem constant byte address 0x4 - core index']
  #allocation1 [shape = 'u32[144,128]{1,0:T(1,128)}', space=vmem, size = 0x12000, scoped, tag = 'internal scratch']
  #allocation2 [shape = 'f32[16,384]{1,0:T(8,128)}', space=vmem, size = 0x6000, scoped, tag = 'scratch operand']
  %s0 = inlined_call_operand.vmem [shape: bf16[16,2048], index: 0, kind: input, shape index: {}]
  %s1 = inlined_call_operand.hbm [shape: bf16[2048,768], index: 1, kind: input, shape index: {}]
  %s2 = inlined_call_operand.hbm [shape: f32[2,768], index: 2, kind: input, shape index: {}]
  %s3 = inlined_call_operand.vmem [shape: f32[2,16,1], index: 3, kind: output, shape index: {}]
  %s4 = sld [smem:[#allocation0]]
  $region84: #{mos_predictor.1} parent=0
    _
  %s6 = ssub.s32 1, %s4
  %s7 = scalar_select 0, %s6, %s4
  $region1: #{mos_predictor.1} parent=0
    #allocation3 [shape = 'u8[65536]{0}', space=vmem, size = 0x10000, scoped, tag = 'input window, operand 0']
    #allocation4 [shape = 'u8[1572864]{0}', space=vmem, size = 0x180000, scoped, tag = 'input window, operand 1']
    #allocation5 [shape = 's32[2]{0}', space=sflag, size = 0x8, scoped, tag = 'scoped memory for mos_predictor.1']
    #allocation6 [shape = 'u8[6144]{0}', space=vmem, size = 0x1800, scoped, tag = 'input window, operand 2']
    #allocation7 [shape = 's32[2]{0}', space=sflag, size = 0x8, scoped, tag = 'scoped memory for mos_predictor.1']
    %8 = vsyncpa [#allocation5], 0
    %s9 = scalar_lea.sflag [#allocation5], 1
    %10 = vsyncpa %s9, 0
    %11 = vsyncpa [#allocation7], 0
    %s12 = scalar_lea.sflag [#allocation7], 1
    %13 = vsyncpa %s12, 0
    loop: start=0, step=1, limit=6
    $region2: #{mos_predictor.1} parent=1 // loop_pre_header
      _
    $region3: #{mos_predictor.1} parent=1 // loop_header
      %s15 = sphi 0, %s19
      %p16 = scmp.ge.s32.totalorder %s15, 6
      %s22 = sphi 0, %s41
      %s23 = sphi 0, %s37
      %s24 = sphi 0, %s33
      %s25 = sphi 0, %s22
      %s26 = sphi 0, %s23
      %s27 = sphi 0, %s24
      %s28 = sphi 0, %s25
      %s29 = sphi 0, %s26
      %s30 = sphi 0, %s27
      %s46 = sphi 0, %s48
      %s49 = sphi 0, %s46
      %s50 = sphi 0, %s49
      %s66 = sphi 0, %s50
      %s74 = sphi 0, %s76
      %s77 = sphi 0, %s74
      %s78 = sphi 0, %s77
      %s94 = sphi 0, %s78
      %s100 = sphi 0, %s102
      %s103 = sphi 0, %s100
      %s104 = sphi 0, %s103
      %s120 = sphi 0, %s104
      %s128 = sphi 0, %s130
      %s131 = sphi 0, %s128
      %s132 = sphi 0, %s131
      %s148 = sphi 0, %s132
    $region4: #{mos_predictor.1} parent=1 // loop_header_branch
      %18 = sbr.rel (%p16) target = $region8
    $region5: #{mos_predictor.1} parent=1 // loop_body
      %s20 = ssub.s32 %s15, 1
      %s21 = ssub.s32 %s15, 2
      %s31 = sadd.s32 1, %s24
      %p32 = scmp.ge.s32.totalorder %s31, 2
      %s33 = scalar_select %p32, 0, %s31
      %s34 = sadd.s32 1, %s23
      %s35 = scalar_select %p32, %s34, %s23
      %p36 = scmp.ge.s32.totalorder %s35, 2
      %s37 = scalar_select %p36, 0, %s35
      %s38 = sadd.s32 1, %s22
      %s39 = scalar_select %p36, %s38, %s22
      %p40 = scmp.ge.s32.totalorder %s39, 1
      %s41 = scalar_select %p40, 0, %s39
      %s42 = ssub.s32 %s22, %s41
      %s43 = ssub.s32 %s24, %s33
      %s44 = sor.u32 %s42, %s43
      %p45 = scmp.eq.s32.totalorder %s44, 0
      %s47 = sadd.s32 %s46, 1
      %s48 = scalar_select %p45, %s46, %s47
      %p51 = pneg %p45
      %p52 = scmp.eq.s32.totalorder %s15, 3
      %p53 = por %p51, %p52
      %p54 = scmp.ne.s32.totalorder %s46, %s49
      %p55 = scmp.eq.s32.totalorder %s15, 0
      %p56 = por %p54, %p55
      %p57 = scmp.ne.s32.totalorder %s46, %s49
      %p58 = scmp.eq.s32.totalorder %s20, 3
      %p59 = por %p57, %p58
      %p60 = scmp.ne.s32.totalorder %s49, %s50
      %p61 = scmp.eq.s32.totalorder %s20, 0
      %p62 = por %p60, %p61
      %p63 = scmp.ne.s32.totalorder %s49, %s50
      %p64 = scmp.eq.s32.totalorder %s21, 3
      %p65 = por %p63, %p64
      %p67 = scmp.ne.s32.totalorder %s50, %s66
      %p68 = scmp.eq.s32.totalorder %s21, 0
      %p69 = por %p67, %p68
      %s70 = ssub.s32 %s24, %s33
      %s71 = ssub.s32 %s23, %s37
      %s72 = sor.u32 %s70, %s71
      %p73 = scmp.eq.s32.totalorder %s72, 0
      %s75 = sadd.s32 %s74, 1
      %s76 = scalar_select %p73, %s74, %s75
      %p79 = pneg %p73
      %p80 = scmp.eq.s32.totalorder %s15, 3
      %p81 = por %p79, %p80
      %p82 = scmp.ne.s32.totalorder %s74, %s77
      %p83 = scmp.eq.s32.totalorder %s15, 0
      %p84 = por %p82, %p83
      %p85 = scmp.ne.s32.totalorder %s74, %s77
      %p86 = scmp.eq.s32.totalorder %s20, 3
      %p87 = por %p85, %p86
      %p88 = scmp.ne.s32.totalorder %s77, %s78
      %p89 = scmp.eq.s32.totalorder %s20, 0
      %p90 = por %p88, %p89
      %p91 = scmp.ne.s32.totalorder %s77, %s78
      %p92 = scmp.eq.s32.totalorder %s21, 3
      %p93 = por %p91, %p92
      %p95 = scmp.ne.s32.totalorder %s78, %s94
      %p96 = scmp.eq.s32.totalorder %s21, 0
      %p97 = por %p95, %p96
      %s98 = ssub.s32 %s23, %s37
      %p99 = scmp.eq.s32.totalorder %s98, 0
      %s101 = sadd.s32 %s100, 1
      %s102 = scalar_select %p99, %s100, %s101
      %p105 = pneg %p99
      %p106 = scmp.eq.s32.totalorder %s15, 3
      %p107 = por %p105, %p106
      %p108 = scmp.ne.s32.totalorder %s100, %s103
      %p109 = scmp.eq.s32.totalorder %s15, 0
      %p110 = por %p108, %p109
      %p111 = scmp.ne.s32.totalorder %s100, %s103
      %p112 = scmp.eq.s32.totalorder %s20, 3
      %p113 = por %p111, %p112
      %p114 = scmp.ne.s32.totalorder %s103, %s104
      %p115 = scmp.eq.s32.totalorder %s20, 0
      %p116 = por %p114, %p115
      %p117 = scmp.ne.s32.totalorder %s103, %s104
      %p118 = scmp.eq.s32.totalorder %s21, 3
      %p119 = por %p117, %p118
      %p121 = scmp.ne.s32.totalorder %s104, %s120
      %p122 = scmp.eq.s32.totalorder %s21, 0
      %p123 = por %p121, %p122
      %s124 = ssub.s32 %s23, %s37
      %s125 = ssub.s32 %s22, %s41
      %s126 = sor.u32 %s124, %s125
      %p127 = scmp.eq.s32.totalorder %s126, 0
      %s129 = sadd.s32 %s128, 1
      %s130 = scalar_select %p127, %s128, %s129
      %p133 = pneg %p127
      %p134 = scmp.eq.s32.totalorder %s15, 3
      %p135 = por %p133, %p134
      %p136 = scmp.ne.s32.totalorder %s128, %s131
      %p137 = scmp.eq.s32.totalorder %s15, 0
      %p138 = por %p136, %p137
      %p139 = scmp.ne.s32.totalorder %s128, %s131
      %p140 = scmp.eq.s32.totalorder %s20, 3
      %p141 = por %p139, %p140
      %p142 = scmp.ne.s32.totalorder %s131, %s132
      %p143 = scmp.eq.s32.totalorder %s20, 0
      %p144 = por %p142, %p143
      %p145 = scmp.ne.s32.totalorder %s131, %s132
      %p146 = scmp.eq.s32.totalorder %s21, 3
      %p147 = por %p145, %p146
      %p149 = scmp.ne.s32.totalorder %s132, %s148
      %p150 = scmp.eq.s32.totalorder %s21, 0
      %p151 = por %p149, %p150
      %p152 = scmp.le.s32.totalorder 1, %s15
      %p153 = scmp.lt.s32.totalorder %s15, 5
      %p154 = pnand %p152, %p153
      %p155 = pneg %p154
      // Predicated region
      $region9: #{mos_predictor.1} parent=5 // pred_check
        _
      $region10: #{mos_predictor.1} parent=5 // pred_check_branch
        %157 = sbr.rel (%p154) target = $region12
      $region11: #{mos_predictor.1} parent=5 // pred_region
        %s158 = ssub.s32 %s15, 1
      $region12: #{mos_predictor.1} parent=5 // pred_fallthru
        _
      %p159 = scmp.lt.s32.totalorder %s15, 4
      // Predicated region
      $region13: #{mos_predictor.1} parent=5 // pred_check
        %p160 = pneg %p159
      $region14: #{mos_predictor.1} parent=5 // pred_check_branch
        %162 = sbr.rel (%p160) target = $region16
      $region15: #{mos_predictor.1} parent=5 // pred_region
        // Predicated region
        $region17: #{mos_predictor.1} parent=15 // pred_check
          %p163 = pneg %p56
        $region18: #{mos_predictor.1} parent=15 // pred_check_branch
          %165 = sbr.rel (%p163) target = $region20
        $region19: #{mos_predictor.1} parent=15 // pred_region
          %s166 = sand.u32 %s46, 1
          %s167 = sand.u32 %s46, 1
          %s168 = smul.addr %s167, 64
          %s169 = scalar_lea.vmem [#allocation3], %s168
          %s170 = smul.u32 2, %s22
          %s171 = smul.u32 8, %s24
          %s172 = smul.addr %s170, 16
          %s173 = sadd.s32 %s171, %s172
          %s174 = smul.addr %s173, 4
          %s175 = scalar_lea.vmem %s0, %s174
          // Predicated region
          $region21: #{mos_predictor.1} parent=19 // pred_check
            _
          $region22: #{mos_predictor.1} parent=19 // pred_check_branch
            %177 = sbr.rel (0) target = $region24
          $region23: #{mos_predictor.1} parent=19 // pred_region
            // Predicated region
            $region25: #{mos_predictor.1} parent=23 // pred_check
              _
            $region26: #{mos_predictor.1} parent=23 // pred_check_branch
              %179 = sbr.rel (0) target = $region28
            $region27: #{mos_predictor.1} parent=23 // pred_region
              loop: start=0, step=1, limit=1
              $region29: #{mos_predictor.1} parent=27 // loop_pre_header
                _
              $region30: #{mos_predictor.1} parent=27 // loop_header
                %s181 = sphi 0, %s185
                %p182 = scmp.ge.s32.totalorder %s181, 1
                %s186 = sphi %s175, %s175
                %s187 = sphi %s169, %s169
              $region31: #{mos_predictor.1} parent=27 // loop_header_branch
                %184 = sbr.rel (%p182) target = $region35
              $region32: #{mos_predictor.1} parent=27 // loop_body
                %v188 = vld [vmem:[%s186] sm:$0xff]
                %189 = vst [vmem:[%s187] sm:$0xff] %v188
                %v190 = vld [vmem:[%s186 + $0x8] sm:$0xff]
                %191 = vst [vmem:[%s187 + $0x8] sm:$0xff] %v190
                %v192 = vld [vmem:[%s186 + $0x10] sm:$0xff]
                %193 = vst [vmem:[%s187 + $0x10] sm:$0xff] %v192
                %v194 = vld [vmem:[%s186 + $0x18] sm:$0xff]
                %195 = vst [vmem:[%s187 + $0x18] sm:$0xff] %v194
                %v196 = vld [vmem:[%s186 + $0x40] sm:$0xff]
                %197 = vst [vmem:[%s187 + $0x20] sm:$0xff] %v196
                %v198 = vld [vmem:[%s186 + $0x48] sm:$0xff]
                %199 = vst [vmem:[%s187 + $0x28] sm:$0xff] %v198
                %v200 = vld [vmem:[%s186 + $0x50] sm:$0xff]
                %201 = vst [vmem:[%s187 + $0x30] sm:$0xff] %v200
                %v202 = vld [vmem:[%s186 + $0x58] sm:$0xff]
                %203 = vst [vmem:[%s187 + $0x38] sm:$0xff] %v202
              $region33: #{mos_predictor.1} parent=27 // loop_footer
                %s185 = sadd.s32 1, %s181
              $region34: #{mos_predictor.1} parent=27 // loop_footer_branch
                %180 = sbr.rel target = $region30
              $region35: #{mos_predictor.1} parent=27 // loop_exit
                _
            $region28: #{mos_predictor.1} parent=23 // pred_fallthru
              _
            // Predicated region
            $region36: #{mos_predictor.1} parent=23 // pred_check
              _
            $region37: #{mos_predictor.1} parent=23 // pred_check_branch
              %205 = sbr.rel target = $region39
            $region38: #{mos_predictor.1} parent=23 // pred_region
              _
            $region39: #{mos_predictor.1} parent=23 // pred_fallthru
              _
          $region24: #{mos_predictor.1} parent=19 // pred_fallthru
            _
          %206 = vnop
        $region20: #{mos_predictor.1} parent=15 // pred_fallthru
          _
        // Predicated region
        $region40: #{mos_predictor.1} parent=15 // pred_check
          %p207 = pneg %p84
        $region41: #{mos_predictor.1} parent=15 // pred_check_branch
          %209 = sbr.rel (%p207) target = $region43
        $region42: #{mos_predictor.1} parent=15 // pred_region
          %s210 = sand.u32 %s74, 1
          %s211 = scalar_lea.sflag [#allocation5], %s210
          %s212 = sand.u32 %s74, 1
          %s213 = smul.addr %s212, 1536
          %s214 = scalar_lea.vmem [#allocation4], %s213
          %s215 = smul.u32 128, %s24
          %s216 = smul.u32 3, %s23
          %s218 = ssub.s32 24576, 24576
          %219 = vsyncadd %s211, %s218
          %s220 = smul.addr %s215, 6
          %s221 = sadd.s32 %s216, %s220
          %s222 = smul.addr %s221, 64
          %s223 = scalar_lea.hbm %s1, %s222
          %s224 = sshll.u32 %s214, 4
          %s225 = int_to_ptr.vmem [resolvable:$true] %s224
          %230 = dma.hbm_to_vmem [thread:$0]  %s223, 24576, %s225, %s211, 384, 192, 12
        $region43: #{mos_predictor.1} parent=15 // pred_fallthru
          _
        // Predicated region
        $region44: #{mos_predictor.1} parent=15 // pred_check
          %p231 = pneg %p110
        $region45: #{mos_predictor.1} parent=15 // pred_check_branch
          %233 = sbr.rel (%p231) target = $region47
        $region46: #{mos_predictor.1} parent=15 // pred_region
          %s234 = sand.u32 %s100, 1
          %s235 = scalar_lea.sflag [#allocation7], %s234
          %s236 = sand.u32 %s100, 1
          %s237 = smul.addr %s236, 6
          %s238 = scalar_lea.vmem [#allocation6], %s237
          %s239 = smul.u32 3, %s23
          %s241 = ssub.s32 96, 96
          %242 = vsyncadd %s235, %s241
          %s243 = smul.addr %s239, 32
          %s244 = scalar_lea.hbm %s2, %s243
          %s246 = sshll.u32 %s238, 4
          %s247 = int_to_ptr.vmem [resolvable:$true] %s246
          %249 = dma.hbm_to_vmem [thread:$0]  %s244, 96, %s247, %s235
        $region47: #{mos_predictor.1} parent=15 // pred_fallthru
          _
      $region16: #{mos_predictor.1} parent=5 // pred_fallthru
        _
      %p250 = scmp.le.s32.totalorder 1, %s15
      %p251 = scmp.lt.s32.totalorder %s15, 5
      %p252 = pnand %p250, %p251
      %p253 = pneg %p252
      // Predicated region
      $region48: #{mos_predictor.1} parent=5 // pred_check
        _
      $region49: #{mos_predictor.1} parent=5 // pred_check_branch
        %255 = sbr.rel (%p252) target = $region51
      $region50: #{mos_predictor.1} parent=5 // pred_region
        %s256 = ssub.s32 %s15, 1
        %s257 = sand.u32 %s49, 1
        %s258 = sand.u32 %s49, 1
        %s259 = smul.addr %s258, 64
        %s260 = scalar_lea.vmem [#allocation3], %s259
        // Predicated region
        $region52: #{mos_predictor.1} parent=50 // pred_check
          %p261 = pneg %p62
        $region53: #{mos_predictor.1} parent=50 // pred_check_branch
          %263 = sbr.rel (%p261) target = $region55
        $region54: #{mos_predictor.1} parent=50 // pred_region
          _
        $region55: #{mos_predictor.1} parent=50 // pred_fallthru
          _
        %s264 = sand.u32 %s77, 1
        %s265 = scalar_lea.sflag [#allocation5], %s264
        %s266 = sand.u32 %s77, 1
        %s267 = smul.addr %s266, 1536
        %s268 = scalar_lea.vmem [#allocation4], %s267
        // Predicated region
        $region56: #{mos_predictor.1} parent=50 // pred_check
          %p269 = pneg %p90
        $region57: #{mos_predictor.1} parent=50 // pred_check_branch
          %271 = sbr.rel (%p269) target = $region59
        $region58: #{mos_predictor.1} parent=50 // pred_region
          %272 = dma.done %s265, 24576
        $region59: #{mos_predictor.1} parent=50 // pred_fallthru
          _
        %s273 = sand.u32 %s103, 1
        %s274 = scalar_lea.sflag [#allocation7], %s273
        %s275 = sand.u32 %s103, 1
        %s276 = smul.addr %s275, 6
        %s277 = scalar_lea.vmem [#allocation6], %s276
        // Predicated region
        $region60: #{mos_predictor.1} parent=50 // pred_check
          %p278 = pneg %p116
        $region61: #{mos_predictor.1} parent=50 // pred_check_branch
          %280 = sbr.rel (%p278) target = $region63
        $region62: #{mos_predictor.1} parent=50 // pred_region
          %281 = dma.done %s274, 96
        $region63: #{mos_predictor.1} parent=50 // pred_fallthru
          _
        %s282 = sand.u32 %s49, 1
        %s283 = sand.u32 %s49, 1
        %s284 = smul.addr %s283, 64
        %s285 = scalar_lea.vmem [#allocation3], %s284
        %p286 = pneg %p62
        %p287 = pneg %p59
        %s288 = sand.u32 %s77, 1
        %s289 = scalar_lea.sflag [#allocation5], %s288
        %s290 = sand.u32 %s77, 1
        %s291 = smul.addr %s290, 1536
        %s292 = scalar_lea.vmem [#allocation4], %s291
        %p293 = pneg %p90
        %p294 = pneg %p87
        %s295 = sand.u32 %s103, 1
        %s296 = scalar_lea.sflag [#allocation7], %s295
        %s297 = sand.u32 %s103, 1
        %s298 = smul.addr %s297, 6
        %s299 = scalar_lea.vmem [#allocation6], %s298
        %p300 = pneg %p116
        %p301 = pneg %p113
        %p302 = pneg %p144
        %p303 = pneg %p141
        %s304 = smul.u32 2, %s25
        %p305 = scmp.lt.s32.totalorder %s26, 1
        %s306 = scalar_select %p305, %s26, 1
        %p307 = scmp.lt.s32.totalorder %s304, 1
        %s308 = scalar_select %p307, %s304, 1
        %s309 = smul.addr %s306, 2
        %s310 = sadd.s32 %s308, %s309
        %s311 = smul.addr %s310, 8
        %s312 = scalar_lea.vmem %s3, %s311
        %s313 = smul.u32 2, %s25
        %s314 = smul.u32 8, %s27
        %s315 = smul.u32 128, %s27
        %s316 = smul.u32 3, %s26
        %s317 = smul.u32 3, %s26
        %s318 = smul.u32 2, %s25
        %p319 = scmp.lt.s32.totalorder %s26, 1
        %s320 = scalar_select %p319, %s26, 1
        %p321 = scmp.lt.s32.totalorder %s318, 1
        %s322 = scalar_select %p321, %s318, 1
        %s323 = smul.addr %s320, 2
        %s324 = sadd.s32 %s322, %s323
        %s325 = smul.addr %s324, 8
        %s326 = scalar_lea.vmem %s3, %s325
        %s327 = smul.u32 2, %s25
        %p329 = scmp.eq.s32.totalorder %s27, 0
        // Predicated region
        $region64: #{mos_predictor.1} parent=50 // pred_check
          %p330 = pneg %p329
        $region65: #{mos_predictor.1} parent=50 // pred_check_branch
          %332 = sbr.rel (%p330) target = $region67
        $region66: #{mos_predictor.1} parent=50 // pred_region
          %333 = vst [vmem:[#allocation2] sm:$0xff] 0.0
          %334 = vst [vmem:[#allocation2 + $0x8] sm:$0xff] 0.0
          %335 = vst [vmem:[#allocation2 + $0x10] sm:$0xff] 0.0
          %336 = vst [vmem:[#allocation2 + $0x18] sm:$0xff] 0.0
          %337 = vst [vmem:[#allocation2 + $0x20] sm:$0xff] 0.0
          %338 = vst [vmem:[#allocation2 + $0x28] sm:$0xff] 0.0
        $region67: #{mos_predictor.1} parent=50 // pred_fallthru
          _
        %v339 = vld [vmem:[#allocation2] sm:$0xff]
        %v340 = vld [vmem:[#allocation2 + $0x8] sm:$0xff]
        %v341 = vld [vmem:[#allocation2 + $0x10] sm:$0xff]
        %v342 = vld [vmem:[#allocation2 + $0x18] sm:$0xff]
        %v343 = vld [vmem:[#allocation2 + $0x20] sm:$0xff]
        %v344 = vld [vmem:[#allocation2 + $0x28] sm:$0xff]
        %v345 = vld [vmem:[%s260] sm:$0xff]
        %v346 = vld [vmem:[%s260 + $0x8] sm:$0xff]
        %v347 = vld [vmem:[%s260 + $0x10] sm:$0xff]
        %v348 = vld [vmem:[%s260 + $0x18] sm:$0xff]
        %v349 = vld [vmem:[%s260 + $0x20] sm:$0xff]
        %v350 = vld [vmem:[%s260 + $0x28] sm:$0xff]
        %v351 = vld [vmem:[%s260 + $0x30] sm:$0xff]
        %v352 = vld [vmem:[%s260 + $0x38] sm:$0xff]
        %v353 = vld [vmem:[%s268] sm:$0xff]
        %v354 = vld [vmem:[%s268 + $0x8] sm:$0xf]
        %v355 = vld [vmem:[%s268 + $0xc] sm:$0xff]
        %v356 = vld [vmem:[%s268 + $0x14] sm:$0xf]
        %v357 = vld [vmem:[%s268 + $0x18] sm:$0xff]
        %v358 = vld [vmem:[%s268 + $0x20] sm:$0xf]
        %v359 = vld [vmem:[%s268 + $0x24] sm:$0xff]
        %v360 = vld [vmem:[%s268 + $0x2c] sm:$0xf]
        %v361 = vld [vmem:[%s268 + $0x30] sm:$0xff]
        %v362 = vld [vmem:[%s268 + $0x38] sm:$0xf]
        %v363 = vld [vmem:[%s268 + $0x3c] sm:$0xff]
        %v364 = vld [vmem:[%s268 + $0x44] sm:$0xf]
        %v365 = vld [vmem:[%s268 + $0x48] sm:$0xff]
        %v366 = vld [vmem:[%s268 + $0x50] sm:$0xf]
        %v367 = vld [vmem:[%s268 + $0x54] sm:$0xff]
        %v368 = vld [vmem:[%s268 + $0x5c] sm:$0xf]
        %v369 = vld [vmem:[%s268 + $0x60] sm:$0xff]
        %v370 = vld [vmem:[%s268 + $0x68] sm:$0xf]
        %v371 = vld [vmem:[%s268 + $0x6c] sm:$0xff]
        %v372 = vld [vmem:[%s268 + $0x74] sm:$0xf]
        %v373 = vld [vmem:[%s268 + $0x78] sm:$0xff]
        %v374 = vld [vmem:[%s268 + $0x80] sm:$0xf]
        %v375 = vld [vmem:[%s268 + $0x84] sm:$0xff]
        %v376 = vld [vmem:[%s268 + $0x8c] sm:$0xf]
        %v377 = vld [vmem:[%s268 + $0x90] sm:$0xff]
        %v378 = vld [vmem:[%s268 + $0x98] sm:$0xf]
        %v379 = vld [vmem:[%s268 + $0x9c] sm:$0xff]
        %v380 = vld [vmem:[%s268 + $0xa4] sm:$0xf]
        %v381 = vld [vmem:[%s268 + $0xa8] sm:$0xff]
        %v382 = vld [vmem:[%s268 + $0xb0] sm:$0xf]
        %v383 = vld [vmem:[%s268 + $0xb4] sm:$0xff]
        %v384 = vld [vmem:[%s268 + $0xbc] sm:$0xf]
        %v385 = vld [vmem:[%s268 + $0xc0] sm:$0xff]
        %v386 = vld [vmem:[%s268 + $0xc8] sm:$0xf]
        %v387 = vld [vmem:[%s268 + $0xcc] sm:$0xff]
        %v388 = vld [vmem:[%s268 + $0xd4] sm:$0xf]
        %v389 = vld [vmem:[%s268 + $0xd8] sm:$0xff]
        %v390 = vld [vmem:[%s268 + $0xe0] sm:$0xf]
        %v391 = vld [vmem:[%s268 + $0xe4] sm:$0xff]
        %v392 = vld [vmem:[%s268 + $0xec] sm:$0xf]
        %v393 = vld [vmem:[%s268 + $0xf0] sm:$0xff]
        %v394 = vld [vmem:[%s268 + $0xf8] sm:$0xf]
        %v395 = vld [vmem:[%s268 + $0xfc] sm:$0xff]
        %v396 = vld [vmem:[%s268 + $0x104] sm:$0xf]
        %v397 = vld [vmem:[%s268 + $0x108] sm:$0xff]
        %v398 = vld [vmem:[%s268 + $0x110] sm:$0xf]
        %v399 = vld [vmem:[%s268 + $0x114] sm:$0xff]
        %v400 = vld [vmem:[%s268 + $0x11c] sm:$0xf]
        %v401 = vld [vmem:[%s268 + $0x120] sm:$0xff]
        %v402 = vld [vmem:[%s268 + $0x128] sm:$0xf]
        %v403 = vld [vmem:[%s268 + $0x12c] sm:$0xff]
        %v404 = vld [vmem:[%s268 + $0x134] sm:$0xf]
        %v405 = vld [vmem:[%s268 + $0x138] sm:$0xff]
        %v406 = vld [vmem:[%s268 + $0x140] sm:$0xf]
        %v407 = vld [vmem:[%s268 + $0x144] sm:$0xff]
        %v408 = vld [vmem:[%s268 + $0x14c] sm:$0xf]
        %v409 = vld [vmem:[%s268 + $0x150] sm:$0xff]
        %v410 = vld [vmem:[%s268 + $0x158] sm:$0xf]
        %v411 = vld [vmem:[%s268 + $0x15c] sm:$0xff]
        %v412 = vld [vmem:[%s268 + $0x164] sm:$0xf]
        %v413 = vld [vmem:[%s268 + $0x168] sm:$0xff]
        %v414 = vld [vmem:[%s268 + $0x170] sm:$0xf]
        %v415 = vld [vmem:[%s268 + $0x174] sm:$0xff]
        %v416 = vld [vmem:[%s268 + $0x17c] sm:$0xf]
        %v417 = vld [vmem:[%s268 + $0x180] sm:$0xff]
        %v418 = vld [vmem:[%s268 + $0x188] sm:$0xf]
        %v419 = vld [vmem:[%s268 + $0x18c] sm:$0xff]
        %v420 = vld [vmem:[%s268 + $0x194] sm:$0xf]
        %v421 = vld [vmem:[%s268 + $0x198] sm:$0xff]
        %v422 = vld [vmem:[%s268 + $0x1a0] sm:$0xf]
        %v423 = vld [vmem:[%s268 + $0x1a4] sm:$0xff]
        %v424 = vld [vmem:[%s268 + $0x1ac] sm:$0xf]
        %v425 = vld [vmem:[%s268 + $0x1b0] sm:$0xff]
        %v426 = vld [vmem:[%s268 + $0x1b8] sm:$0xf]
        %v427 = vld [vmem:[%s268 + $0x1bc] sm:$0xff]
        %v428 = vld [vmem:[%s268 + $0x1c4] sm:$0xf]
        %v429 = vld [vmem:[%s268 + $0x1c8] sm:$0xff]
        %v430 = vld [vmem:[%s268 + $0x1d0] sm:$0xf]
        %v431 = vld [vmem:[%s268 + $0x1d4] sm:$0xff]
        %v432 = vld [vmem:[%s268 + $0x1dc] sm:$0xf]
        %v433 = vld [vmem:[%s268 + $0x1e0] sm:$0xff]
        %v434 = vld [vmem:[%s268 + $0x1e8] sm:$0xf]
        %v435 = vld [vmem:[%s268 + $0x1ec] sm:$0xff]
        %v436 = vld [vmem:[%s268 + $0x1f4] sm:$0xf]
        %v437 = vld [vmem:[%s268 + $0x1f8] sm:$0xff]
        %v438 = vld [vmem:[%s268 + $0x200] sm:$0xf]
        %v439 = vld [vmem:[%s268 + $0x204] sm:$0xff]
        %v440 = vld [vmem:[%s268 + $0x20c] sm:$0xf]
        %v441 = vld [vmem:[%s268 + $0x210] sm:$0xff]
        %v442 = vld [vmem:[%s268 + $0x218] sm:$0xf]
        %v443 = vld [vmem:[%s268 + $0x21c] sm:$0xff]
        %v444 = vld [vmem:[%s268 + $0x224] sm:$0xf]
        %v445 = vld [vmem:[%s268 + $0x228] sm:$0xff]
        %v446 = vld [vmem:[%s268 + $0x230] sm:$0xf]
        %v447 = vld [vmem:[%s268 + $0x234] sm:$0xff]
        %v448 = vld [vmem:[%s268 + $0x23c] sm:$0xf]
        %v449 = vld [vmem:[%s268 + $0x240] sm:$0xff]
        %v450 = vld [vmem:[%s268 + $0x248] sm:$0xf]
        %v451 = vld [vmem:[%s268 + $0x24c] sm:$0xff]
        %v452 = vld [vmem:[%s268 + $0x254] sm:$0xf]
        %v453 = vld [vmem:[%s268 + $0x258] sm:$0xff]
        %v454 = vld [vmem:[%s268 + $0x260] sm:$0xf]
        %v455 = vld [vmem:[%s268 + $0x264] sm:$0xff]
        %v456 = vld [vmem:[%s268 + $0x26c] sm:$0xf]
        %v457 = vld [vmem:[%s268 + $0x270] sm:$0xff]
        %v458 = vld [vmem:[%s268 + $0x278] sm:$0xf]
        %v459 = vld [vmem:[%s268 + $0x27c] sm:$0xff]
        %v460 = vld [vmem:[%s268 + $0x284] sm:$0xf]
        %v461 = vld [vmem:[%s268 + $0x288] sm:$0xff]
        %v462 = vld [vmem:[%s268 + $0x290] sm:$0xf]
        %v463 = vld [vmem:[%s268 + $0x294] sm:$0xff]
        %v464 = vld [vmem:[%s268 + $0x29c] sm:$0xf]
        %v465 = vld [vmem:[%s268 + $0x2a0] sm:$0xff]
        %v466 = vld [vmem:[%s268 + $0x2a8] sm:$0xf]
        %v467 = vld [vmem:[%s268 + $0x2ac] sm:$0xff]
        %v468 = vld [vmem:[%s268 + $0x2b4] sm:$0xf]
        %v469 = vld [vmem:[%s268 + $0x2b8] sm:$0xff]
        %v470 = vld [vmem:[%s268 + $0x2c0] sm:$0xf]
        %v471 = vld [vmem:[%s268 + $0x2c4] sm:$0xff]
        %v472 = vld [vmem:[%s268 + $0x2cc] sm:$0xf]
        %v473 = vld [vmem:[%s268 + $0x2d0] sm:$0xff]
        %v474 = vld [vmem:[%s268 + $0x2d8] sm:$0xf]
        %v475 = vld [vmem:[%s268 + $0x2dc] sm:$0xff]
        %v476 = vld [vmem:[%s268 + $0x2e4] sm:$0xf]
        %v477 = vld [vmem:[%s268 + $0x2e8] sm:$0xff]
        %v478 = vld [vmem:[%s268 + $0x2f0] sm:$0xf]
        %v479 = vld [vmem:[%s268 + $0x2f4] sm:$0xff]
        %v480 = vld [vmem:[%s268 + $0x2fc] sm:$0xf]
        %v481 = vld [vmem:[%s268 + $0x300] sm:$0xff]
        %v482 = vld [vmem:[%s268 + $0x308] sm:$0xf]
        %v483 = vld [vmem:[%s268 + $0x30c] sm:$0xff]
        %v484 = vld [vmem:[%s268 + $0x314] sm:$0xf]
        %v485 = vld [vmem:[%s268 + $0x318] sm:$0xff]
        %v486 = vld [vmem:[%s268 + $0x320] sm:$0xf]
        %v487 = vld [vmem:[%s268 + $0x324] sm:$0xff]
        %v488 = vld [vmem:[%s268 + $0x32c] sm:$0xf]
        %v489 = vld [vmem:[%s268 + $0x330] sm:$0xff]
        %v490 = vld [vmem:[%s268 + $0x338] sm:$0xf]
        %v491 = vld [vmem:[%s268 + $0x33c] sm:$0xff]
        %v492 = vld [vmem:[%s268 + $0x344] sm:$0xf]
        %v493 = vld [vmem:[%s268 + $0x348] sm:$0xff]
        %v494 = vld [vmem:[%s268 + $0x350] sm:$0xf]
        %v495 = vld [vmem:[%s268 + $0x354] sm:$0xff]
        %v496 = vld [vmem:[%s268 + $0x35c] sm:$0xf]
        %v497 = vld [vmem:[%s268 + $0x360] sm:$0xff]
        %v498 = vld [vmem:[%s268 + $0x368] sm:$0xf]
        %v499 = vld [vmem:[%s268 + $0x36c] sm:$0xff]
        %v500 = vld [vmem:[%s268 + $0x374] sm:$0xf]
        %v501 = vld [vmem:[%s268 + $0x378] sm:$0xff]
        %v502 = vld [vmem:[%s268 + $0x380] sm:$0xf]
        %v503 = vld [vmem:[%s268 + $0x384] sm:$0xff]
        %v504 = vld [vmem:[%s268 + $0x38c] sm:$0xf]
        %v505 = vld [vmem:[%s268 + $0x390] sm:$0xff]
        %v506 = vld [vmem:[%s268 + $0x398] sm:$0xf]
        %v507 = vld [vmem:[%s268 + $0x39c] sm:$0xff]
        %v508 = vld [vmem:[%s268 + $0x3a4] sm:$0xf]
        %v509 = vld [vmem:[%s268 + $0x3a8] sm:$0xff]
        %v510 = vld [vmem:[%s268 + $0x3b0] sm:$0xf]
        %v511 = vld [vmem:[%s268 + $0x3b4] sm:$0xff]
        %v512 = vld [vmem:[%s268 + $0x3bc] sm:$0xf]
        %v513 = vld [vmem:[%s268 + $0x3c0] sm:$0xff]
        %v514 = vld [vmem:[%s268 + $0x3c8] sm:$0xf]
        %v515 = vld [vmem:[%s268 + $0x3cc] sm:$0xff]
        %v516 = vld [vmem:[%s268 + $0x3d4] sm:$0xf]
        %v517 = vld [vmem:[%s268 + $0x3d8] sm:$0xff]
        %v518 = vld [vmem:[%s268 + $0x3e0] sm:$0xf]
        %v519 = vld [vmem:[%s268 + $0x3e4] sm:$0xff]
        %v520 = vld [vmem:[%s268 + $0x3ec] sm:$0xf]
        %v521 = vld [vmem:[%s268 + $0x3f0] sm:$0xff]
        %v522 = vld [vmem:[%s268 + $0x3f8] sm:$0xf]
        %v523 = vld [vmem:[%s268 + $0x3fc] sm:$0xff]
        %v524 = vld [vmem:[%s268 + $0x404] sm:$0xf]
        %v525 = vld [vmem:[%s268 + $0x408] sm:$0xff]
        %v526 = vld [vmem:[%s268 + $0x410] sm:$0xf]
        %v527 = vld [vmem:[%s268 + $0x414] sm:$0xff]
        %v528 = vld [vmem:[%s268 + $0x41c] sm:$0xf]
        %v529 = vld [vmem:[%s268 + $0x420] sm:$0xff]
        %v530 = vld [vmem:[%s268 + $0x428] sm:$0xf]
        %v531 = vld [vmem:[%s268 + $0x42c] sm:$0xff]
        %v532 = vld [vmem:[%s268 + $0x434] sm:$0xf]
        %v533 = vld [vmem:[%s268 + $0x438] sm:$0xff]
        %v534 = vld [vmem:[%s268 + $0x440] sm:$0xf]
        %v535 = vld [vmem:[%s268 + $0x444] sm:$0xff]
        %v536 = vld [vmem:[%s268 + $0x44c] sm:$0xf]
        %v537 = vld [vmem:[%s268 + $0x450] sm:$0xff]
        %v538 = vld [vmem:[%s268 + $0x458] sm:$0xf]
        %v539 = vld [vmem:[%s268 + $0x45c] sm:$0xff]
        %v540 = vld [vmem:[%s268 + $0x464] sm:$0xf]
        %v541 = vld [vmem:[%s268 + $0x468] sm:$0xff]
        %v542 = vld [vmem:[%s268 + $0x470] sm:$0xf]
        %v543 = vld [vmem:[%s268 + $0x474] sm:$0xff]
        %v544 = vld [vmem:[%s268 + $0x47c] sm:$0xf]
        %v545 = vld [vmem:[%s268 + $0x480] sm:$0xff]
        %v546 = vld [vmem:[%s268 + $0x488] sm:$0xf]
        %v547 = vld [vmem:[%s268 + $0x48c] sm:$0xff]
        %v548 = vld [vmem:[%s268 + $0x494] sm:$0xf]
        %v549 = vld [vmem:[%s268 + $0x498] sm:$0xff]
        %v550 = vld [vmem:[%s268 + $0x4a0] sm:$0xf]
        %v551 = vld [vmem:[%s268 + $0x4a4] sm:$0xff]
        %v552 = vld [vmem:[%s268 + $0x4ac] sm:$0xf]
        %v553 = vld [vmem:[%s268 + $0x4b0] sm:$0xff]
        %v554 = vld [vmem:[%s268 + $0x4b8] sm:$0xf]
        %v555 = vld [vmem:[%s268 + $0x4bc] sm:$0xff]
        %v556 = vld [vmem:[%s268 + $0x4c4] sm:$0xf]
        %v557 = vld [vmem:[%s268 + $0x4c8] sm:$0xff]
        %v558 = vld [vmem:[%s268 + $0x4d0] sm:$0xf]
        %v559 = vld [vmem:[%s268 + $0x4d4] sm:$0xff]
        %v560 = vld [vmem:[%s268 + $0x4dc] sm:$0xf]
        %v561 = vld [vmem:[%s268 + $0x4e0] sm:$0xff]
        %v562 = vld [vmem:[%s268 + $0x4e8] sm:$0xf]
        %v563 = vld [vmem:[%s268 + $0x4ec] sm:$0xff]
        %v564 = vld [vmem:[%s268 + $0x4f4] sm:$0xf]
        %v565 = vld [vmem:[%s268 + $0x4f8] sm:$0xff]
        %v566 = vld [vmem:[%s268 + $0x500] sm:$0xf]
        %v567 = vld [vmem:[%s268 + $0x504] sm:$0xff]
        %v568 = vld [vmem:[%s268 + $0x50c] sm:$0xf]
        %v569 = vld [vmem:[%s268 + $0x510] sm:$0xff]
        %v570 = vld [vmem:[%s268 + $0x518] sm:$0xf]
        %v571 = vld [vmem:[%s268 + $0x51c] sm:$0xff]
        %v572 = vld [vmem:[%s268 + $0x524] sm:$0xf]
        %v573 = vld [vmem:[%s268 + $0x528] sm:$0xff]
        %v574 = vld [vmem:[%s268 + $0x530] sm:$0xf]
        %v575 = vld [vmem:[%s268 + $0x534] sm:$0xff]
        %v576 = vld [vmem:[%s268 + $0x53c] sm:$0xf]
        %v577 = vld [vmem:[%s268 + $0x540] sm:$0xff]
        %v578 = vld [vmem:[%s268 + $0x548] sm:$0xf]
        %v579 = vld [vmem:[%s268 + $0x54c] sm:$0xff]
        %v580 = vld [vmem:[%s268 + $0x554] sm:$0xf]
        %v581 = vld [vmem:[%s268 + $0x558] sm:$0xff]
        %v582 = vld [vmem:[%s268 + $0x560] sm:$0xf]
        %v583 = vld [vmem:[%s268 + $0x564] sm:$0xff]
        %v584 = vld [vmem:[%s268 + $0x56c] sm:$0xf]
        %v585 = vld [vmem:[%s268 + $0x570] sm:$0xff]
        %v586 = vld [vmem:[%s268 + $0x578] sm:$0xf]
        %v587 = vld [vmem:[%s268 + $0x57c] sm:$0xff]
        %v588 = vld [vmem:[%s268 + $0x584] sm:$0xf]
        %v589 = vld [vmem:[%s268 + $0x588] sm:$0xff]
        %v590 = vld [vmem:[%s268 + $0x590] sm:$0xf]
        %v591 = vld [vmem:[%s268 + $0x594] sm:$0xff]
        %v592 = vld [vmem:[%s268 + $0x59c] sm:$0xf]
        %v593 = vld [vmem:[%s268 + $0x5a0] sm:$0xff]
        %v594 = vld [vmem:[%s268 + $0x5a8] sm:$0xf]
        %v595 = vld [vmem:[%s268 + $0x5ac] sm:$0xff]
        %v596 = vld [vmem:[%s268 + $0x5b4] sm:$0xf]
        %v597 = vld [vmem:[%s268 + $0x5b8] sm:$0xff]
        %v598 = vld [vmem:[%s268 + $0x5c0] sm:$0xf]
        %v599 = vld [vmem:[%s268 + $0x5c4] sm:$0xff]
        %v600 = vld [vmem:[%s268 + $0x5cc] sm:$0xf]
        %v601 = vld [vmem:[%s268 + $0x5d0] sm:$0xff]
        %v602 = vld [vmem:[%s268 + $0x5d8] sm:$0xf]
        %v603 = vld [vmem:[%s268 + $0x5dc] sm:$0xff]
        %v604 = vld [vmem:[%s268 + $0x5e4] sm:$0xf]
        %v605 = vld [vmem:[%s268 + $0x5e8] sm:$0xff]
        %v606 = vld [vmem:[%s268 + $0x5f0] sm:$0xf]
        %v607 = vld [vmem:[%s268 + $0x5f4] sm:$0xff]
        %v608 = vld [vmem:[%s268 + $0x5fc] sm:$0xf]
        %v617 = vunpack.c.l.b16 %v345
        %v618 = vunpack.c.h.b16 %v345
        %v619 = vunpack.c.l.b16 %v346
        %v620 = vunpack.c.h.b16 %v346
        %v621 = vunpack.c.l.b16 %v347
        %v622 = vunpack.c.h.b16 %v347
        %v623 = vunpack.c.l.b16 %v348
        %v624 = vunpack.c.h.b16 %v348
        %v625 = vunpack.c.l.b16 %v349
        %v626 = vunpack.c.h.b16 %v349
        %v627 = vunpack.c.l.b16 %v350
        %v628 = vunpack.c.h.b16 %v350
        %v629 = vunpack.c.l.b16 %v351
        %v630 = vunpack.c.h.b16 %v351
        %v631 = vunpack.c.l.b16 %v352
        %v632 = vunpack.c.h.b16 %v352
        %v633 = vpack.c.b16 %v625, %v617
        %v634 = vpack.c.b16 %v626, %v618
        %v635 = vpack.c.b16 %v627, %v619
        %v636 = vpack.c.b16 %v628, %v620
        %v637 = vpack.c.b16 %v629, %v621
        %v638 = vpack.c.b16 %v630, %v622
        %v639 = vpack.c.b16 %v631, %v623
        %v640 = vpack.c.b16 %v632, %v624
        %v905 = vunpack.c.l.b16 %v353
        %v906 = vunpack.c.h.b16 %v353
        %v907 = vunpack.c.l.b16 %v354
        %v908 = vunpack.c.l.b16 %v355
        %v909 = vunpack.c.h.b16 %v355
        %v910 = vunpack.c.l.b16 %v356
        %v911 = vunpack.c.l.b16 %v357
        %v912 = vunpack.c.h.b16 %v357
        %v913 = vunpack.c.l.b16 %v358
        %v914 = vunpack.c.l.b16 %v359
        %v915 = vunpack.c.h.b16 %v359
        %v916 = vunpack.c.l.b16 %v360
        %v917 = vunpack.c.l.b16 %v361
        %v918 = vunpack.c.h.b16 %v361
        %v919 = vunpack.c.l.b16 %v362
        %v920 = vunpack.c.l.b16 %v363
        %v921 = vunpack.c.h.b16 %v363
        %v922 = vunpack.c.l.b16 %v364
        %v923 = vunpack.c.l.b16 %v365
        %v924 = vunpack.c.h.b16 %v365
        %v925 = vunpack.c.l.b16 %v366
        %v926 = vunpack.c.l.b16 %v367
        %v927 = vunpack.c.h.b16 %v367
        %v928 = vunpack.c.l.b16 %v368
        %v929 = vunpack.c.l.b16 %v369
        %v930 = vunpack.c.h.b16 %v369
        %v931 = vunpack.c.l.b16 %v370
        %v932 = vunpack.c.l.b16 %v371
        %v933 = vunpack.c.h.b16 %v371
        %v934 = vunpack.c.l.b16 %v372
        %v935 = vunpack.c.l.b16 %v373
        %v936 = vunpack.c.h.b16 %v373
        %v937 = vunpack.c.l.b16 %v374
        %v938 = vunpack.c.l.b16 %v375
        %v939 = vunpack.c.h.b16 %v375
        %v940 = vunpack.c.l.b16 %v376
        %v941 = vunpack.c.l.b16 %v377
        %v942 = vunpack.c.h.b16 %v377
        %v943 = vunpack.c.l.b16 %v378
        %v944 = vunpack.c.l.b16 %v379
        %v945 = vunpack.c.h.b16 %v379
        %v946 = vunpack.c.l.b16 %v380
        %v947 = vunpack.c.l.b16 %v381
        %v948 = vunpack.c.h.b16 %v381
        %v949 = vunpack.c.l.b16 %v382
        %v950 = vunpack.c.l.b16 %v383
        %v951 = vunpack.c.h.b16 %v383
        %v952 = vunpack.c.l.b16 %v384
        %v953 = vunpack.c.l.b16 %v385
        %v954 = vunpack.c.h.b16 %v385
        %v955 = vunpack.c.l.b16 %v386
        %v956 = vunpack.c.l.b16 %v387
        %v957 = vunpack.c.h.b16 %v387
        %v958 = vunpack.c.l.b16 %v388
        %v959 = vunpack.c.l.b16 %v389
        %v960 = vunpack.c.h.b16 %v389
        %v961 = vunpack.c.l.b16 %v390
        %v962 = vunpack.c.l.b16 %v391
        %v963 = vunpack.c.h.b16 %v391
        %v964 = vunpack.c.l.b16 %v392
        %v965 = vunpack.c.l.b16 %v393
        %v966 = vunpack.c.h.b16 %v393
        %v967 = vunpack.c.l.b16 %v394
        %v968 = vunpack.c.l.b16 %v395
        %v969 = vunpack.c.h.b16 %v395
        %v970 = vunpack.c.l.b16 %v396
        %v971 = vunpack.c.l.b16 %v397
        %v972 = vunpack.c.h.b16 %v397
        %v973 = vunpack.c.l.b16 %v398
        %v974 = vunpack.c.l.b16 %v399
        %v975 = vunpack.c.h.b16 %v399
        %v976 = vunpack.c.l.b16 %v400
        %v977 = vunpack.c.l.b16 %v401
        %v978 = vunpack.c.h.b16 %v401
        %v979 = vunpack.c.l.b16 %v402
        %v980 = vunpack.c.l.b16 %v403
        %v981 = vunpack.c.h.b16 %v403
        %v982 = vunpack.c.l.b16 %v404
        %v983 = vunpack.c.l.b16 %v405
        %v984 = vunpack.c.h.b16 %v405
        %v985 = vunpack.c.l.b16 %v406
        %v986 = vunpack.c.l.b16 %v407
        %v987 = vunpack.c.h.b16 %v407
        %v988 = vunpack.c.l.b16 %v408
        %v989 = vunpack.c.l.b16 %v409
        %v990 = vunpack.c.h.b16 %v409
        %v991 = vunpack.c.l.b16 %v410
        %v992 = vunpack.c.l.b16 %v411
        %v993 = vunpack.c.h.b16 %v411
        %v994 = vunpack.c.l.b16 %v412
        %v995 = vunpack.c.l.b16 %v413
        %v996 = vunpack.c.h.b16 %v413
        %v997 = vunpack.c.l.b16 %v414
        %v998 = vunpack.c.l.b16 %v415
        %v999 = vunpack.c.h.b16 %v415
        %v1000 = vunpack.c.l.b16 %v416
        %v1001 = vunpack.c.l.b16 %v417
        %v1002 = vunpack.c.h.b16 %v417
        %v1003 = vunpack.c.l.b16 %v418
        %v1004 = vunpack.c.l.b16 %v419
        %v1005 = vunpack.c.h.b16 %v419
        %v1006 = vunpack.c.l.b16 %v420
        %v1007 = vunpack.c.l.b16 %v421
        %v1008 = vunpack.c.h.b16 %v421
        %v1009 = vunpack.c.l.b16 %v422
        %v1010 = vunpack.c.l.b16 %v423
        %v1011 = vunpack.c.h.b16 %v423
        %v1012 = vunpack.c.l.b16 %v424
        %v1013 = vunpack.c.l.b16 %v425
        %v1014 = vunpack.c.h.b16 %v425
        %v1015 = vunpack.c.l.b16 %v426
        %v1016 = vunpack.c.l.b16 %v427
        %v1017 = vunpack.c.h.b16 %v427
        %v1018 = vunpack.c.l.b16 %v428
        %v1019 = vunpack.c.l.b16 %v429
        %v1020 = vunpack.c.h.b16 %v429
        %v1021 = vunpack.c.l.b16 %v430
        %v1022 = vunpack.c.l.b16 %v431
        %v1023 = vunpack.c.h.b16 %v431
        %v1024 = vunpack.c.l.b16 %v432
        %v1025 = vunpack.c.l.b16 %v433
        %v1026 = vunpack.c.h.b16 %v433
        %v1027 = vunpack.c.l.b16 %v434
        %v1028 = vunpack.c.l.b16 %v435
        %v1029 = vunpack.c.h.b16 %v435
        %v1030 = vunpack.c.l.b16 %v436
        %v1031 = vunpack.c.l.b16 %v437
        %v1032 = vunpack.c.h.b16 %v437
        %v1033 = vunpack.c.l.b16 %v438
        %v1034 = vunpack.c.l.b16 %v439
        %v1035 = vunpack.c.h.b16 %v439
        %v1036 = vunpack.c.l.b16 %v440
        %v1037 = vunpack.c.l.b16 %v441
        %v1038 = vunpack.c.h.b16 %v441
        %v1039 = vunpack.c.l.b16 %v442
        %v1040 = vunpack.c.l.b16 %v443
        %v1041 = vunpack.c.h.b16 %v443
        %v1042 = vunpack.c.l.b16 %v444
        %v1043 = vunpack.c.l.b16 %v445
        %v1044 = vunpack.c.h.b16 %v445
        %v1045 = vunpack.c.l.b16 %v446
        %v1046 = vunpack.c.l.b16 %v447
        %v1047 = vunpack.c.h.b16 %v447
        %v1048 = vunpack.c.l.b16 %v448
        %v1049 = vunpack.c.l.b16 %v449
        %v1050 = vunpack.c.h.b16 %v449
        %v1051 = vunpack.c.l.b16 %v450
        %v1052 = vunpack.c.l.b16 %v451
        %v1053 = vunpack.c.h.b16 %v451
        %v1054 = vunpack.c.l.b16 %v452
        %v1055 = vunpack.c.l.b16 %v453
        %v1056 = vunpack.c.h.b16 %v453
        %v1057 = vunpack.c.l.b16 %v454
        %v1058 = vunpack.c.l.b16 %v455
        %v1059 = vunpack.c.h.b16 %v455
        %v1060 = vunpack.c.l.b16 %v456
        %v1061 = vunpack.c.l.b16 %v457
        %v1062 = vunpack.c.h.b16 %v457
        %v1063 = vunpack.c.l.b16 %v458
        %v1064 = vunpack.c.l.b16 %v459
        %v1065 = vunpack.c.h.b16 %v459
        %v1066 = vunpack.c.l.b16 %v460
        %v1067 = vunpack.c.l.b16 %v461
        %v1068 = vunpack.c.h.b16 %v461
        %v1069 = vunpack.c.l.b16 %v462
        %v1070 = vunpack.c.l.b16 %v463
        %v1071 = vunpack.c.h.b16 %v463
        %v1072 = vunpack.c.l.b16 %v464
        %v1073 = vunpack.c.l.b16 %v465
        %v1074 = vunpack.c.h.b16 %v465
        %v1075 = vunpack.c.l.b16 %v466
        %v1076 = vunpack.c.l.b16 %v467
        %v1077 = vunpack.c.h.b16 %v467
        %v1078 = vunpack.c.l.b16 %v468
        %v1079 = vunpack.c.l.b16 %v469
        %v1080 = vunpack.c.h.b16 %v469
        %v1081 = vunpack.c.l.b16 %v470
        %v1082 = vunpack.c.l.b16 %v471
        %v1083 = vunpack.c.h.b16 %v471
        %v1084 = vunpack.c.l.b16 %v472
        %v1085 = vunpack.c.l.b16 %v473
        %v1086 = vunpack.c.h.b16 %v473
        %v1087 = vunpack.c.l.b16 %v474
        %v1088 = vunpack.c.l.b16 %v475
        %v1089 = vunpack.c.h.b16 %v475
        %v1090 = vunpack.c.l.b16 %v476
        %v1091 = vunpack.c.l.b16 %v477
        %v1092 = vunpack.c.h.b16 %v477
        %v1093 = vunpack.c.l.b16 %v478
        %v1094 = vunpack.c.l.b16 %v479
        %v1095 = vunpack.c.h.b16 %v479
        %v1096 = vunpack.c.l.b16 %v480
        %v1097 = vunpack.c.l.b16 %v481
        %v1098 = vunpack.c.h.b16 %v481
        %v1099 = vunpack.c.l.b16 %v482
        %v1100 = vunpack.c.l.b16 %v483
        %v1101 = vunpack.c.h.b16 %v483
        %v1102 = vunpack.c.l.b16 %v484
        %v1103 = vunpack.c.l.b16 %v485
        %v1104 = vunpack.c.h.b16 %v485
        %v1105 = vunpack.c.l.b16 %v486
        %v1106 = vunpack.c.l.b16 %v487
        %v1107 = vunpack.c.h.b16 %v487
        %v1108 = vunpack.c.l.b16 %v488
        %v1109 = vunpack.c.l.b16 %v489
        %v1110 = vunpack.c.h.b16 %v489
        %v1111 = vunpack.c.l.b16 %v490
        %v1112 = vunpack.c.l.b16 %v491
        %v1113 = vunpack.c.h.b16 %v491
        %v1114 = vunpack.c.l.b16 %v492
        %v1115 = vunpack.c.l.b16 %v493
        %v1116 = vunpack.c.h.b16 %v493
        %v1117 = vunpack.c.l.b16 %v494
        %v1118 = vunpack.c.l.b16 %v495
        %v1119 = vunpack.c.h.b16 %v495
        %v1120 = vunpack.c.l.b16 %v496
        %v1121 = vunpack.c.l.b16 %v497
        %v1122 = vunpack.c.h.b16 %v497
        %v1123 = vunpack.c.l.b16 %v498
        %v1124 = vunpack.c.l.b16 %v499
        %v1125 = vunpack.c.h.b16 %v499
        %v1126 = vunpack.c.l.b16 %v500
        %v1127 = vunpack.c.l.b16 %v501
        %v1128 = vunpack.c.h.b16 %v501
        %v1129 = vunpack.c.l.b16 %v502
        %v1130 = vunpack.c.l.b16 %v503
        %v1131 = vunpack.c.h.b16 %v503
        %v1132 = vunpack.c.l.b16 %v504
        %v1133 = vunpack.c.l.b16 %v505
        %v1134 = vunpack.c.h.b16 %v505
        %v1135 = vunpack.c.l.b16 %v506
        %v1136 = vunpack.c.l.b16 %v507
        %v1137 = vunpack.c.h.b16 %v507
        %v1138 = vunpack.c.l.b16 %v508
        %v1139 = vunpack.c.l.b16 %v509
        %v1140 = vunpack.c.h.b16 %v509
        %v1141 = vunpack.c.l.b16 %v510
        %v1142 = vunpack.c.l.b16 %v511
        %v1143 = vunpack.c.h.b16 %v511
        %v1144 = vunpack.c.l.b16 %v512
        %v1145 = vunpack.c.l.b16 %v513
        %v1146 = vunpack.c.h.b16 %v513
        %v1147 = vunpack.c.l.b16 %v514
        %v1148 = vunpack.c.l.b16 %v515
        %v1149 = vunpack.c.h.b16 %v515
        %v1150 = vunpack.c.l.b16 %v516
        %v1151 = vunpack.c.l.b16 %v517
        %v1152 = vunpack.c.h.b16 %v517
        %v1153 = vunpack.c.l.b16 %v518
        %v1154 = vunpack.c.l.b16 %v519
        %v1155 = vunpack.c.h.b16 %v519
        %v1156 = vunpack.c.l.b16 %v520
        %v1157 = vunpack.c.l.b16 %v521
        %v1158 = vunpack.c.h.b16 %v521
        %v1159 = vunpack.c.l.b16 %v522
        %v1160 = vunpack.c.l.b16 %v523
        %v1161 = vunpack.c.h.b16 %v523
        %v1162 = vunpack.c.l.b16 %v524
        %v1163 = vunpack.c.l.b16 %v525
        %v1164 = vunpack.c.h.b16 %v525
        %v1165 = vunpack.c.l.b16 %v526
        %v1166 = vunpack.c.l.b16 %v527
        %v1167 = vunpack.c.h.b16 %v527
        %v1168 = vunpack.c.l.b16 %v528
        %v1169 = vunpack.c.l.b16 %v529
        %v1170 = vunpack.c.h.b16 %v529
        %v1171 = vunpack.c.l.b16 %v530
        %v1172 = vunpack.c.l.b16 %v531
        %v1173 = vunpack.c.h.b16 %v531
        %v1174 = vunpack.c.l.b16 %v532
        %v1175 = vunpack.c.l.b16 %v533
        %v1176 = vunpack.c.h.b16 %v533
        %v1177 = vunpack.c.l.b16 %v534
        %v1178 = vunpack.c.l.b16 %v535
        %v1179 = vunpack.c.h.b16 %v535
        %v1180 = vunpack.c.l.b16 %v536
        %v1181 = vunpack.c.l.b16 %v537
        %v1182 = vunpack.c.h.b16 %v537
        %v1183 = vunpack.c.l.b16 %v538
        %v1184 = vunpack.c.l.b16 %v539
        %v1185 = vunpack.c.h.b16 %v539
        %v1186 = vunpack.c.l.b16 %v540
        %v1187 = vunpack.c.l.b16 %v541
        %v1188 = vunpack.c.h.b16 %v541
        %v1189 = vunpack.c.l.b16 %v542
        %v1190 = vunpack.c.l.b16 %v543
        %v1191 = vunpack.c.h.b16 %v543
        %v1192 = vunpack.c.l.b16 %v544
        %v1193 = vunpack.c.l.b16 %v545
        %v1194 = vunpack.c.h.b16 %v545
        %v1195 = vunpack.c.l.b16 %v546
        %v1196 = vunpack.c.l.b16 %v547
        %v1197 = vunpack.c.h.b16 %v547
        %v1198 = vunpack.c.l.b16 %v548
        %v1199 = vunpack.c.l.b16 %v549
        %v1200 = vunpack.c.h.b16 %v549
        %v1201 = vunpack.c.l.b16 %v550
        %v1202 = vunpack.c.l.b16 %v551
        %v1203 = vunpack.c.h.b16 %v551
        %v1204 = vunpack.c.l.b16 %v552
        %v1205 = vunpack.c.l.b16 %v553
        %v1206 = vunpack.c.h.b16 %v553
        %v1207 = vunpack.c.l.b16 %v554
        %v1208 = vunpack.c.l.b16 %v555
        %v1209 = vunpack.c.h.b16 %v555
        %v1210 = vunpack.c.l.b16 %v556
        %v1211 = vunpack.c.l.b16 %v557
        %v1212 = vunpack.c.h.b16 %v557
        %v1213 = vunpack.c.l.b16 %v558
        %v1214 = vunpack.c.l.b16 %v559
        %v1215 = vunpack.c.h.b16 %v559
        %v1216 = vunpack.c.l.b16 %v560
        %v1217 = vunpack.c.l.b16 %v561
        %v1218 = vunpack.c.h.b16 %v561
        %v1219 = vunpack.c.l.b16 %v562
        %v1220 = vunpack.c.l.b16 %v563
        %v1221 = vunpack.c.h.b16 %v563
        %v1222 = vunpack.c.l.b16 %v564
        %v1223 = vunpack.c.l.b16 %v565
        %v1224 = vunpack.c.h.b16 %v565
        %v1225 = vunpack.c.l.b16 %v566
        %v1226 = vunpack.c.l.b16 %v567
        %v1227 = vunpack.c.h.b16 %v567
        %v1228 = vunpack.c.l.b16 %v568
        %v1229 = vunpack.c.l.b16 %v569
        %v1230 = vunpack.c.h.b16 %v569
        %v1231 = vunpack.c.l.b16 %v570
        %v1232 = vunpack.c.l.b16 %v571
        %v1233 = vunpack.c.h.b16 %v571
        %v1234 = vunpack.c.l.b16 %v572
        %v1235 = vunpack.c.l.b16 %v573
        %v1236 = vunpack.c.h.b16 %v573
        %v1237 = vunpack.c.l.b16 %v574
        %v1238 = vunpack.c.l.b16 %v575
        %v1239 = vunpack.c.h.b16 %v575
        %v1240 = vunpack.c.l.b16 %v576
        %v1241 = vunpack.c.l.b16 %v577
        %v1242 = vunpack.c.h.b16 %v577
        %v1243 = vunpack.c.l.b16 %v578
        %v1244 = vunpack.c.l.b16 %v579
        %v1245 = vunpack.c.h.b16 %v579
        %v1246 = vunpack.c.l.b16 %v580
        %v1247 = vunpack.c.l.b16 %v581
        %v1248 = vunpack.c.h.b16 %v581
        %v1249 = vunpack.c.l.b16 %v582
        %v1250 = vunpack.c.l.b16 %v583
        %v1251 = vunpack.c.h.b16 %v583
        %v1252 = vunpack.c.l.b16 %v584
        %v1253 = vunpack.c.l.b16 %v585
        %v1254 = vunpack.c.h.b16 %v585
        %v1255 = vunpack.c.l.b16 %v586
        %v1256 = vunpack.c.l.b16 %v587
        %v1257 = vunpack.c.h.b16 %v587
        %v1258 = vunpack.c.l.b16 %v588
        %v1259 = vunpack.c.l.b16 %v589
        %v1260 = vunpack.c.h.b16 %v589
        %v1261 = vunpack.c.l.b16 %v590
        %v1262 = vunpack.c.l.b16 %v591
        %v1263 = vunpack.c.h.b16 %v591
        %v1264 = vunpack.c.l.b16 %v592
        %v1265 = vunpack.c.l.b16 %v593
        %v1266 = vunpack.c.h.b16 %v593
        %v1267 = vunpack.c.l.b16 %v594
        %v1268 = vunpack.c.l.b16 %v595
        %v1269 = vunpack.c.h.b16 %v595
        %v1270 = vunpack.c.l.b16 %v596
        %v1271 = vunpack.c.l.b16 %v597
        %v1272 = vunpack.c.h.b16 %v597
        %v1273 = vunpack.c.l.b16 %v598
        %v1274 = vunpack.c.l.b16 %v599
        %v1275 = vunpack.c.h.b16 %v599
        %v1276 = vunpack.c.l.b16 %v600
        %v1277 = vunpack.c.l.b16 %v601
        %v1278 = vunpack.c.h.b16 %v601
        %v1279 = vunpack.c.l.b16 %v602
        %v1280 = vunpack.c.l.b16 %v603
        %v1281 = vunpack.c.h.b16 %v603
        %v1282 = vunpack.c.l.b16 %v604
        %v1283 = vunpack.c.l.b16 %v605
        %v1284 = vunpack.c.h.b16 %v605
        %v1285 = vunpack.c.l.b16 %v606
        %v1286 = vunpack.c.l.b16 %v607
        %v1287 = vunpack.c.h.b16 %v607
        %v1288 = vunpack.c.l.b16 %v608
        %v1289 = vpack.c.b16 %v908, %v905
        %v1290 = vpack.c.b16 %v909, %v906
        %v1291 = vpack.c.b16 %v910, %v907
        %v1292 = vpack.c.b16 %v914, %v911
        %v1293 = vpack.c.b16 %v915, %v912
        %v1294 = vpack.c.b16 %v916, %v913
        %v1295 = vpack.c.b16 %v920, %v917
        %v1296 = vpack.c.b16 %v921, %v918
        %v1297 = vpack.c.b16 %v922, %v919
        %v1298 = vpack.c.b16 %v926, %v923
        %v1299 = vpack.c.b16 %v927, %v924
        %v1300 = vpack.c.b16 %v928, %v925
        %v1301 = vpack.c.b16 %v932, %v929
        %v1302 = vpack.c.b16 %v933, %v930
        %v1303 = vpack.c.b16 %v934, %v931
        %v1304 = vpack.c.b16 %v938, %v935
        %v1305 = vpack.c.b16 %v939, %v936
        %v1306 = vpack.c.b16 %v940, %v937
        %v1307 = vpack.c.b16 %v944, %v941
        %v1308 = vpack.c.b16 %v945, %v942
        %v1309 = vpack.c.b16 %v946, %v943
        %v1310 = vpack.c.b16 %v950, %v947
        %v1311 = vpack.c.b16 %v951, %v948
        %v1312 = vpack.c.b16 %v952, %v949
        %v1313 = vpack.c.b16 %v956, %v953
        %v1314 = vpack.c.b16 %v957, %v954
        %v1315 = vpack.c.b16 %v958, %v955
        %v1316 = vpack.c.b16 %v962, %v959
        %v1317 = vpack.c.b16 %v963, %v960
        %v1318 = vpack.c.b16 %v964, %v961
        %v1319 = vpack.c.b16 %v968, %v965
        %v1320 = vpack.c.b16 %v969, %v966
        %v1321 = vpack.c.b16 %v970, %v967
        %v1322 = vpack.c.b16 %v974, %v971
        %v1323 = vpack.c.b16 %v975, %v972
        %v1324 = vpack.c.b16 %v976, %v973
        %v1325 = vpack.c.b16 %v980, %v977
        %v1326 = vpack.c.b16 %v981, %v978
        %v1327 = vpack.c.b16 %v982, %v979
        %v1328 = vpack.c.b16 %v986, %v983
        %v1329 = vpack.c.b16 %v987, %v984
        %v1330 = vpack.c.b16 %v988, %v985
        %v1331 = vpack.c.b16 %v992, %v989
        %v1332 = vpack.c.b16 %v993, %v990
        %v1333 = vpack.c.b16 %v994, %v991
        %v1334 = vpack.c.b16 %v998, %v995
        %v1335 = vpack.c.b16 %v999, %v996
        %v1336 = vpack.c.b16 %v1000, %v997
        %v1337 = vpack.c.b16 %v1004, %v1001
        %v1338 = vpack.c.b16 %v1005, %v1002
        %v1339 = vpack.c.b16 %v1006, %v1003
        %v1340 = vpack.c.b16 %v1010, %v1007
        %v1341 = vpack.c.b16 %v1011, %v1008
        %v1342 = vpack.c.b16 %v1012, %v1009
        %v1343 = vpack.c.b16 %v1016, %v1013
        %v1344 = vpack.c.b16 %v1017, %v1014
        %v1345 = vpack.c.b16 %v1018, %v1015
        %v1346 = vpack.c.b16 %v1022, %v1019
        %v1347 = vpack.c.b16 %v1023, %v1020
        %v1348 = vpack.c.b16 %v1024, %v1021
        %v1349 = vpack.c.b16 %v1028, %v1025
        %v1350 = vpack.c.b16 %v1029, %v1026
        %v1351 = vpack.c.b16 %v1030, %v1027
        %v1352 = vpack.c.b16 %v1034, %v1031
        %v1353 = vpack.c.b16 %v1035, %v1032
        %v1354 = vpack.c.b16 %v1036, %v1033
        %v1355 = vpack.c.b16 %v1040, %v1037
        %v1356 = vpack.c.b16 %v1041, %v1038
        %v1357 = vpack.c.b16 %v1042, %v1039
        %v1358 = vpack.c.b16 %v1046, %v1043
        %v1359 = vpack.c.b16 %v1047, %v1044
        %v1360 = vpack.c.b16 %v1048, %v1045
        %v1361 = vpack.c.b16 %v1052, %v1049
        %v1362 = vpack.c.b16 %v1053, %v1050
        %v1363 = vpack.c.b16 %v1054, %v1051
        %v1364 = vpack.c.b16 %v1058, %v1055
        %v1365 = vpack.c.b16 %v1059, %v1056
        %v1366 = vpack.c.b16 %v1060, %v1057
        %v1367 = vpack.c.b16 %v1064, %v1061
        %v1368 = vpack.c.b16 %v1065, %v1062
        %v1369 = vpack.c.b16 %v1066, %v1063
        %v1370 = vpack.c.b16 %v1070, %v1067
        %v1371 = vpack.c.b16 %v1071, %v1068
        %v1372 = vpack.c.b16 %v1072, %v1069
        %v1373 = vpack.c.b16 %v1076, %v1073
        %v1374 = vpack.c.b16 %v1077, %v1074
        %v1375 = vpack.c.b16 %v1078, %v1075
        %v1376 = vpack.c.b16 %v1082, %v1079
        %v1377 = vpack.c.b16 %v1083, %v1080
        %v1378 = vpack.c.b16 %v1084, %v1081
        %v1379 = vpack.c.b16 %v1088, %v1085
        %v1380 = vpack.c.b16 %v1089, %v1086
        %v1381 = vpack.c.b16 %v1090, %v1087
        %v1382 = vpack.c.b16 %v1094, %v1091
        %v1383 = vpack.c.b16 %v1095, %v1092
        %v1384 = vpack.c.b16 %v1096, %v1093
        %v1385 = vpack.c.b16 %v1100, %v1097
        %v1386 = vpack.c.b16 %v1101, %v1098
        %v1387 = vpack.c.b16 %v1102, %v1099
        %v1388 = vpack.c.b16 %v1106, %v1103
        %v1389 = vpack.c.b16 %v1107, %v1104
        %v1390 = vpack.c.b16 %v1108, %v1105
        %v1391 = vpack.c.b16 %v1112, %v1109
        %v1392 = vpack.c.b16 %v1113, %v1110
        %v1393 = vpack.c.b16 %v1114, %v1111
        %v1394 = vpack.c.b16 %v1118, %v1115
        %v1395 = vpack.c.b16 %v1119, %v1116
        %v1396 = vpack.c.b16 %v1120, %v1117
        %v1397 = vpack.c.b16 %v1124, %v1121
        %v1398 = vpack.c.b16 %v1125, %v1122
        %v1399 = vpack.c.b16 %v1126, %v1123
        %v1400 = vpack.c.b16 %v1130, %v1127
        %v1401 = vpack.c.b16 %v1131, %v1128
        %v1402 = vpack.c.b16 %v1132, %v1129
        %v1403 = vpack.c.b16 %v1136, %v1133
        %v1404 = vpack.c.b16 %v1137, %v1134
        %v1405 = vpack.c.b16 %v1138, %v1135
        %v1406 = vpack.c.b16 %v1142, %v1139
        %v1407 = vpack.c.b16 %v1143, %v1140
        %v1408 = vpack.c.b16 %v1144, %v1141
        %v1409 = vpack.c.b16 %v1148, %v1145
        %v1410 = vpack.c.b16 %v1149, %v1146
        %v1411 = vpack.c.b16 %v1150, %v1147
        %v1412 = vpack.c.b16 %v1154, %v1151
        %v1413 = vpack.c.b16 %v1155, %v1152
        %v1414 = vpack.c.b16 %v1156, %v1153
        %v1415 = vpack.c.b16 %v1160, %v1157
        %v1416 = vpack.c.b16 %v1161, %v1158
        %v1417 = vpack.c.b16 %v1162, %v1159
        %v1418 = vpack.c.b16 %v1166, %v1163
        %v1419 = vpack.c.b16 %v1167, %v1164
        %v1420 = vpack.c.b16 %v1168, %v1165
        %v1421 = vpack.c.b16 %v1172, %v1169
        %v1422 = vpack.c.b16 %v1173, %v1170
        %v1423 = vpack.c.b16 %v1174, %v1171
        %v1424 = vpack.c.b16 %v1178, %v1175
        %v1425 = vpack.c.b16 %v1179, %v1176
        %v1426 = vpack.c.b16 %v1180, %v1177
        %v1427 = vpack.c.b16 %v1184, %v1181
        %v1428 = vpack.c.b16 %v1185, %v1182
        %v1429 = vpack.c.b16 %v1186, %v1183
        %v1430 = vpack.c.b16 %v1190, %v1187
        %v1431 = vpack.c.b16 %v1191, %v1188
        %v1432 = vpack.c.b16 %v1192, %v1189
        %v1433 = vpack.c.b16 %v1196, %v1193
        %v1434 = vpack.c.b16 %v1197, %v1194
        %v1435 = vpack.c.b16 %v1198, %v1195
        %v1436 = vpack.c.b16 %v1202, %v1199
        %v1437 = vpack.c.b16 %v1203, %v1200
        %v1438 = vpack.c.b16 %v1204, %v1201
        %v1439 = vpack.c.b16 %v1208, %v1205
        %v1440 = vpack.c.b16 %v1209, %v1206
        %v1441 = vpack.c.b16 %v1210, %v1207
        %v1442 = vpack.c.b16 %v1214, %v1211
        %v1443 = vpack.c.b16 %v1215, %v1212
        %v1444 = vpack.c.b16 %v1216, %v1213
        %v1445 = vpack.c.b16 %v1220, %v1217
        %v1446 = vpack.c.b16 %v1221, %v1218
        %v1447 = vpack.c.b16 %v1222, %v1219
        %v1448 = vpack.c.b16 %v1226, %v1223
        %v1449 = vpack.c.b16 %v1227, %v1224
        %v1450 = vpack.c.b16 %v1228, %v1225
        %v1451 = vpack.c.b16 %v1232, %v1229
        %v1452 = vpack.c.b16 %v1233, %v1230
        %v1453 = vpack.c.b16 %v1234, %v1231
        %v1454 = vpack.c.b16 %v1238, %v1235
        %v1455 = vpack.c.b16 %v1239, %v1236
        %v1456 = vpack.c.b16 %v1240, %v1237
        %v1457 = vpack.c.b16 %v1244, %v1241
        %v1458 = vpack.c.b16 %v1245, %v1242
        %v1459 = vpack.c.b16 %v1246, %v1243
        %v1460 = vpack.c.b16 %v1250, %v1247
        %v1461 = vpack.c.b16 %v1251, %v1248
        %v1462 = vpack.c.b16 %v1252, %v1249
        %v1463 = vpack.c.b16 %v1256, %v1253
        %v1464 = vpack.c.b16 %v1257, %v1254
        %v1465 = vpack.c.b16 %v1258, %v1255
        %v1466 = vpack.c.b16 %v1262, %v1259
        %v1467 = vpack.c.b16 %v1263, %v1260
        %v1468 = vpack.c.b16 %v1264, %v1261
        %v1469 = vpack.c.b16 %v1268, %v1265
        %v1470 = vpack.c.b16 %v1269, %v1266
        %v1471 = vpack.c.b16 %v1270, %v1267
        %v1472 = vpack.c.b16 %v1274, %v1271
        %v1473 = vpack.c.b16 %v1275, %v1272
        %v1474 = vpack.c.b16 %v1276, %v1273
        %v1475 = vpack.c.b16 %v1280, %v1277
        %v1476 = vpack.c.b16 %v1281, %v1278
        %v1477 = vpack.c.b16 %v1282, %v1279
        %v1478 = vpack.c.b16 %v1286, %v1283
        %v1479 = vpack.c.b16 %v1287, %v1284
        %v1480 = vpack.c.b16 %v1288, %v1285
        %1673 = vmatprep.subr.bf16.mxu0 %v1290
        %1674 = vmatpush1.bf16.msra.mxu0 %v1289
        %1675 = vmatprep.subr.bf16.mxu0 %v1293
        %1676 = vmatpush1.bf16.msra.mxu0 %v1292
        %1677 = vmatprep.subr.bf16.mxu0 %v1296
        %1678 = vmatpush1.bf16.msra.mxu0 %v1295
        %1679 = vmatprep.subr.bf16.mxu0 %v1299
        %1680 = vmatpush1.bf16.msra.mxu0 %v1298
        %1681 = vmatprep.subr.bf16.mxu0 %v1302
        %1682 = vmatpush1.bf16.msra.mxu0 %v1301
        %1683 = vmatprep.subr.bf16.mxu0 %v1305
        %1684 = vmatpush1.bf16.msra.mxu0 %v1304
        %1685 = vmatprep.subr.bf16.mxu0 %v1308
        %1686 = vmatpush1.bf16.msra.mxu0 %v1307
        %1687 = vmatprep.subr.bf16.mxu0 %v1311
        %1688 = vmatpush1.bf16.msra.mxu0 %v1310
        %1689 = vmatprep.subr.bf16.mxu0 %v1314
        %1690 = vmatpush1.bf16.msra.mxu0 %v1313
        %1691 = vmatprep.subr.bf16.mxu0 %v1317
        %1692 = vmatpush1.bf16.msra.mxu0 %v1316
        %1693 = vmatprep.subr.bf16.mxu0 %v1320
        %1694 = vmatpush1.bf16.msra.mxu0 %v1319
        %1695 = vmatprep.subr.bf16.mxu0 %v1323
        %1696 = vmatpush1.bf16.msra.mxu0 %v1322
        %1697 = vmatprep.subr.bf16.mxu0 %v1326
        %1698 = vmatpush1.bf16.msra.mxu0 %v1325
        %1699 = vmatprep.subr.bf16.mxu0 %v1329
        %1700 = vmatpush1.bf16.msra.mxu0 %v1328
        %1701 = vmatprep.subr.bf16.mxu0 %v1332
        %1702 = vmatpush1.bf16.msra.mxu0 %v1331
        %1703 = vmatprep.subr.bf16.mxu0 %v1335
        %1704 = vmatpush1.bf16.msra.mxu0 %v1334
        %1705 = vmatprep.mubr.bf16.mxu0 %v634
        %1706 = vmatmul.mubr.bf16.gmra.mrb[0].mxu0 %v633
        %v1707 = vpop.f32.mrb[0].mxu0
        %v1708 = vadd.f32 0.0, %v1707
        %v1709 = vpop.f32.mrb[0].mxu0
        %v1710 = vadd.f32 0.0, %v1709
        %v1711 = vpop.f32.mrb[0].mxu0
        %v1712 = vadd.f32 0.0, %v1711
        %v1713 = vpop.f32.mrb[0].mxu0
        %v1714 = vadd.f32 0.0, %v1713
        %1715 = vdwg.mxu0
        %1716 = vmatprep.subr.bf16.mxu0 %v1338
        %1717 = vmatpush1.bf16.msra.mxu0 %v1337
        %1718 = vmatprep.subr.bf16.mxu0 %v1341
        %1719 = vmatpush1.bf16.msra.mxu0 %v1340
        %1720 = vmatprep.subr.bf16.mxu0 %v1344
        %1721 = vmatpush1.bf16.msra.mxu0 %v1343
        %1722 = vmatprep.subr.bf16.mxu0 %v1347
        %1723 = vmatpush1.bf16.msra.mxu0 %v1346
        %1724 = vmatprep.subr.bf16.mxu0 %v1350
        %1725 = vmatpush1.bf16.msra.mxu0 %v1349
        %1726 = vmatprep.subr.bf16.mxu0 %v1353
        %1727 = vmatpush1.bf16.msra.mxu0 %v1352
        %1728 = vmatprep.subr.bf16.mxu0 %v1356
        %1729 = vmatpush1.bf16.msra.mxu0 %v1355
        %1730 = vmatprep.subr.bf16.mxu0 %v1359
        %1731 = vmatpush1.bf16.msra.mxu0 %v1358
        %1732 = vmatprep.subr.bf16.mxu0 %v1362
        %1733 = vmatpush1.bf16.msra.mxu0 %v1361
        %1734 = vmatprep.subr.bf16.mxu0 %v1365
        %1735 = vmatpush1.bf16.msra.mxu0 %v1364
        %1736 = vmatprep.subr.bf16.mxu0 %v1368
        %1737 = vmatpush1.bf16.msra.mxu0 %v1367
        %1738 = vmatprep.subr.bf16.mxu0 %v1371
        %1739 = vmatpush1.bf16.msra.mxu0 %v1370
        %1740 = vmatprep.subr.bf16.mxu0 %v1374
        %1741 = vmatpush1.bf16.msra.mxu0 %v1373
        %1742 = vmatprep.subr.bf16.mxu0 %v1377
        %1743 = vmatpush1.bf16.msra.mxu0 %v1376
        %1744 = vmatprep.subr.bf16.mxu0 %v1380
        %1745 = vmatpush1.bf16.msra.mxu0 %v1379
        %1746 = vmatprep.subr.bf16.mxu0 %v1383
        %1747 = vmatpush1.bf16.msra.mxu0 %v1382
        %1748 = vmatprep.mubr.bf16.mxu0 %v636
        %1749 = vmatmul.mubr.bf16.gmra.mrb[0].mxu0 %v635
        %v1750 = vpop.f32.mrb[0].mxu0
        %v1751 = vadd.f32 %v1708, %v1750
        %v1752 = vpop.f32.mrb[0].mxu0
        %v1753 = vadd.f32 %v1710, %v1752
        %v1754 = vpop.f32.mrb[0].mxu0
        %v1755 = vadd.f32 %v1712, %v1754
        %v1756 = vpop.f32.mrb[0].mxu0
        %v1757 = vadd.f32 %v1714, %v1756
        %1758 = vdwg.mxu0
        %1759 = vmatprep.subr.bf16.mxu0 %v1386
        %1760 = vmatpush1.bf16.msra.mxu0 %v1385
        %1761 = vmatprep.subr.bf16.mxu0 %v1389
        %1762 = vmatpush1.bf16.msra.mxu0 %v1388
        %1763 = vmatprep.subr.bf16.mxu0 %v1392
        %1764 = vmatpush1.bf16.msra.mxu0 %v1391
        %1765 = vmatprep.subr.bf16.mxu0 %v1395
        %1766 = vmatpush1.bf16.msra.mxu0 %v1394
        %1767 = vmatprep.subr.bf16.mxu0 %v1398
        %1768 = vmatpush1.bf16.msra.mxu0 %v1397
        %1769 = vmatprep.subr.bf16.mxu0 %v1401
        %1770 = vmatpush1.bf16.msra.mxu0 %v1400
        %1771 = vmatprep.subr.bf16.mxu0 %v1404
        %1772 = vmatpush1.bf16.msra.mxu0 %v1403
        %1773 = vmatprep.subr.bf16.mxu0 %v1407
        %1774 = vmatpush1.bf16.msra.mxu0 %v1406
        %1775 = vmatprep.subr.bf16.mxu0 %v1410
        %1776 = vmatpush1.bf16.msra.mxu0 %v1409
        %1777 = vmatprep.subr.bf16.mxu0 %v1413
        %1778 = vmatpush1.bf16.msra.mxu0 %v1412
        %1779 = vmatprep.subr.bf16.mxu0 %v1416
        %1780 = vmatpush1.bf16.msra.mxu0 %v1415
        %1781 = vmatprep.subr.bf16.mxu0 %v1419
        %1782 = vmatpush1.bf16.msra.mxu0 %v1418
        %1783 = vmatprep.subr.bf16.mxu0 %v1422
        %1784 = vmatpush1.bf16.msra.mxu0 %v1421
        %1785 = vmatprep.subr.bf16.mxu0 %v1425
        %1786 = vmatpush1.bf16.msra.mxu0 %v1424
        %1787 = vmatprep.subr.bf16.mxu0 %v1428
        %1788 = vmatpush1.bf16.msra.mxu0 %v1427
        %1789 = vmatprep.subr.bf16.mxu0 %v1431
        %1790 = vmatpush1.bf16.msra.mxu0 %v1430
        %1791 = vmatprep.mubr.bf16.mxu0 %v638
        %1792 = vmatmul.mubr.bf16.gmra.mrb[0].mxu0 %v637
        %v1793 = vpop.f32.mrb[0].mxu0
        %v1794 = vadd.f32 %v1751, %v1793
        %v1795 = vpop.f32.mrb[0].mxu0
        %v1796 = vadd.f32 %v1753, %v1795
        %v1797 = vpop.f32.mrb[0].mxu0
        %v1798 = vadd.f32 %v1755, %v1797
        %v1799 = vpop.f32.mrb[0].mxu0
        %v1800 = vadd.f32 %v1757, %v1799
        %1801 = vdwg.mxu0
        %1802 = vmatprep.subr.bf16.mxu0 %v1434
        %1803 = vmatpush1.bf16.msra.mxu0 %v1433
        %1804 = vmatprep.subr.bf16.mxu0 %v1437
        %1805 = vmatpush1.bf16.msra.mxu0 %v1436
        %1806 = vmatprep.subr.bf16.mxu0 %v1440
        %1807 = vmatpush1.bf16.msra.mxu0 %v1439
        %1808 = vmatprep.subr.bf16.mxu0 %v1443
        %1809 = vmatpush1.bf16.msra.mxu0 %v1442
        %1810 = vmatprep.subr.bf16.mxu0 %v1446
        %1811 = vmatpush1.bf16.msra.mxu0 %v1445
        %1812 = vmatprep.subr.bf16.mxu0 %v1449
        %1813 = vmatpush1.bf16.msra.mxu0 %v1448
        %1814 = vmatprep.subr.bf16.mxu0 %v1452
        %1815 = vmatpush1.bf16.msra.mxu0 %v1451
        %1816 = vmatprep.subr.bf16.mxu0 %v1455
        %1817 = vmatpush1.bf16.msra.mxu0 %v1454
        %1818 = vmatprep.subr.bf16.mxu0 %v1458
        %1819 = vmatpush1.bf16.msra.mxu0 %v1457
        %1820 = vmatprep.subr.bf16.mxu0 %v1461
        %1821 = vmatpush1.bf16.msra.mxu0 %v1460
        %1822 = vmatprep.subr.bf16.mxu0 %v1464
        %1823 = vmatpush1.bf16.msra.mxu0 %v1463
        %1824 = vmatprep.subr.bf16.mxu0 %v1467
        %1825 = vmatpush1.bf16.msra.mxu0 %v1466
        %1826 = vmatprep.subr.bf16.mxu0 %v1470
        %1827 = vmatpush1.bf16.msra.mxu0 %v1469
        %1828 = vmatprep.subr.bf16.mxu0 %v1473
        %1829 = vmatpush1.bf16.msra.mxu0 %v1472
        %1830 = vmatprep.subr.bf16.mxu0 %v1476
        %1831 = vmatpush1.bf16.msra.mxu0 %v1475
        %1832 = vmatprep.subr.bf16.mxu0 %v1479
        %1833 = vmatpush1.bf16.msra.mxu0 %v1478
        %1834 = vmatprep.mubr.bf16.mxu0 %v640
        %1835 = vmatmul.mubr.bf16.gmra.mrb[0].mxu0 %v639
        %v1836 = vpop.f32.mrb[0].mxu0
        %v1837 = vadd.f32 %v1794, %v1836
        %v1838 = vpop.f32.mrb[0].mxu0
        %v1839 = vadd.f32 %v1796, %v1838
        %v1840 = vpop.f32.mrb[0].mxu0
        %v1841 = vadd.f32 %v1798, %v1840
        %v1842 = vpop.f32.mrb[0].mxu0
        %v1843 = vadd.f32 %v1800, %v1842
        %1844 = vdwg.mxu0
        %1845 = vmatprep.subr.bf16.mxu0 0
        %1846 = vmatpush1.bf16.msra.mxu0 %v1291
        %1847 = vmatprep.subr.bf16.mxu0 0
        %1848 = vmatpush1.bf16.msra.mxu0 %v1294
        %1849 = vmatprep.subr.bf16.mxu0 0
        %1850 = vmatpush1.bf16.msra.mxu0 %v1297
        %1851 = vmatprep.subr.bf16.mxu0 0
        %1852 = vmatpush1.bf16.msra.mxu0 %v1300
        %1853 = vmatprep.subr.bf16.mxu0 0
        %1854 = vmatpush1.bf16.msra.mxu0 %v1303
        %1855 = vmatprep.subr.bf16.mxu0 0
        %1856 = vmatpush1.bf16.msra.mxu0 %v1306
        %1857 = vmatprep.subr.bf16.mxu0 0
        %1858 = vmatpush1.bf16.msra.mxu0 %v1309
        %1859 = vmatprep.subr.bf16.mxu0 0
        %1860 = vmatpush1.bf16.msra.mxu0 %v1312
        %1861 = vmatprep.subr.bf16.mxu0 0
        %1862 = vmatpush1.bf16.msra.mxu0 %v1315
        %1863 = vmatprep.subr.bf16.mxu0 0
        %1864 = vmatpush1.bf16.msra.mxu0 %v1318
        %1865 = vmatprep.subr.bf16.mxu0 0
        %1866 = vmatpush1.bf16.msra.mxu0 %v1321
        %1867 = vmatprep.subr.bf16.mxu0 0
        %1868 = vmatpush1.bf16.msra.mxu0 %v1324
        %1869 = vmatprep.subr.bf16.mxu0 0
        %1870 = vmatpush1.bf16.msra.mxu0 %v1327
        %1871 = vmatprep.subr.bf16.mxu0 0
        %1872 = vmatpush1.bf16.msra.mxu0 %v1330
        %1873 = vmatprep.subr.bf16.mxu0 0
        %1874 = vmatpush1.bf16.msra.mxu0 %v1333
        %1875 = vmatprep.subr.bf16.mxu0 0
        %1876 = vmatpush1.bf16.msra.mxu0 %v1336
        %1877 = vmatprep.mubr.bf16.mxu0 %v634
        %1878 = vmatmul.mubr.bf16.gmra.mrb[0].mxu0 %v633
        %v1879 = vpop.f32.mrb[0].mxu0
        %v1880 = vadd.f32 0.0, %v1879
        %v1881 = vpop.f32.mrb[0].mxu0
        %v1882 = vpop.f32.mrb[0].mxu0
        %v1883 = vadd.f32 0.0, %v1882
        %v1884 = vpop.f32.mrb[0].mxu0
        %1885 = vdwg.mxu0
        %1886 = vmatprep.subr.bf16.mxu0 0
        %1887 = vmatpush1.bf16.msra.mxu0 %v1339
        %1888 = vmatprep.subr.bf16.mxu0 0
        %1889 = vmatpush1.bf16.msra.mxu0 %v1342
        %1890 = vmatprep.subr.bf16.mxu0 0
        %1891 = vmatpush1.bf16.msra.mxu0 %v1345
        %1892 = vmatprep.subr.bf16.mxu0 0
        %1893 = vmatpush1.bf16.msra.mxu0 %v1348
        %1894 = vmatprep.subr.bf16.mxu0 0
        %1895 = vmatpush1.bf16.msra.mxu0 %v1351
        %1896 = vmatprep.subr.bf16.mxu0 0
        %1897 = vmatpush1.bf16.msra.mxu0 %v1354
        %1898 = vmatprep.subr.bf16.mxu0 0
        %1899 = vmatpush1.bf16.msra.mxu0 %v1357
        %1900 = vmatprep.subr.bf16.mxu0 0
        %1901 = vmatpush1.bf16.msra.mxu0 %v1360
        %1902 = vmatprep.subr.bf16.mxu0 0
        %1903 = vmatpush1.bf16.msra.mxu0 %v1363
        %1904 = vmatprep.subr.bf16.mxu0 0
        %1905 = vmatpush1.bf16.msra.mxu0 %v1366
        %1906 = vmatprep.subr.bf16.mxu0 0
        %1907 = vmatpush1.bf16.msra.mxu0 %v1369
        %1908 = vmatprep.subr.bf16.mxu0 0
        %1909 = vmatpush1.bf16.msra.mxu0 %v1372
        %1910 = vmatprep.subr.bf16.mxu0 0
        %1911 = vmatpush1.bf16.msra.mxu0 %v1375
        %1912 = vmatprep.subr.bf16.mxu0 0
        %1913 = vmatpush1.bf16.msra.mxu0 %v1378
        %1914 = vmatprep.subr.bf16.mxu0 0
        %1915 = vmatpush1.bf16.msra.mxu0 %v1381
        %1916 = vmatprep.subr.bf16.mxu0 0
        %1917 = vmatpush1.bf16.msra.mxu0 %v1384
        %1918 = vmatprep.mubr.bf16.mxu0 %v636
        %1919 = vmatmul.mubr.bf16.gmra.mrb[0].mxu0 %v635
        %v1920 = vpop.f32.mrb[0].mxu0
        %v1921 = vadd.f32 %v1880, %v1920
        %v1922 = vpop.f32.mrb[0].mxu0
        %v1923 = vpop.f32.mrb[0].mxu0
        %v1924 = vadd.f32 %v1883, %v1923
        %v1925 = vpop.f32.mrb[0].mxu0
        %1926 = vdwg.mxu0
        %1927 = vmatprep.subr.bf16.mxu0 0
        %1928 = vmatpush1.bf16.msra.mxu0 %v1387
        %1929 = vmatprep.subr.bf16.mxu0 0
        %1930 = vmatpush1.bf16.msra.mxu0 %v1390
        %1931 = vmatprep.subr.bf16.mxu0 0
        %1932 = vmatpush1.bf16.msra.mxu0 %v1393
        %1933 = vmatprep.subr.bf16.mxu0 0
        %1934 = vmatpush1.bf16.msra.mxu0 %v1396
        %1935 = vmatprep.subr.bf16.mxu0 0
        %1936 = vmatpush1.bf16.msra.mxu0 %v1399
        %1937 = vmatprep.subr.bf16.mxu0 0
        %1938 = vmatpush1.bf16.msra.mxu0 %v1402
        %1939 = vmatprep.subr.bf16.mxu0 0
        %1940 = vmatpush1.bf16.msra.mxu0 %v1405
        %1941 = vmatprep.subr.bf16.mxu0 0
        %1942 = vmatpush1.bf16.msra.mxu0 %v1408
        %1943 = vmatprep.subr.bf16.mxu0 0
        %1944 = vmatpush1.bf16.msra.mxu0 %v1411
        %1945 = vmatprep.subr.bf16.mxu0 0
        %1946 = vmatpush1.bf16.msra.mxu0 %v1414
        %1947 = vmatprep.subr.bf16.mxu0 0
        %1948 = vmatpush1.bf16.msra.mxu0 %v1417
        %1949 = vmatprep.subr.bf16.mxu0 0
        %1950 = vmatpush1.bf16.msra.mxu0 %v1420
        %1951 = vmatprep.subr.bf16.mxu0 0
        %1952 = vmatpush1.bf16.msra.mxu0 %v1423
        %1953 = vmatprep.subr.bf16.mxu0 0
        %1954 = vmatpush1.bf16.msra.mxu0 %v1426
        %1955 = vmatprep.subr.bf16.mxu0 0
        %1956 = vmatpush1.bf16.msra.mxu0 %v1429
        %1957 = vmatprep.subr.bf16.mxu0 0
        %1958 = vmatpush1.bf16.msra.mxu0 %v1432
        %1959 = vmatprep.mubr.bf16.mxu0 %v638
        %1960 = vmatmul.mubr.bf16.gmra.mrb[0].mxu0 %v637
        %v1961 = vpop.f32.mrb[0].mxu0
        %v1962 = vadd.f32 %v1921, %v1961
        %v1963 = vpop.f32.mrb[0].mxu0
        %v1964 = vpop.f32.mrb[0].mxu0
        %v1965 = vadd.f32 %v1924, %v1964
        %v1966 = vpop.f32.mrb[0].mxu0
        %1967 = vdwg.mxu0
        %1968 = vmatprep.subr.bf16.mxu0 0
        %1969 = vmatpush1.bf16.msra.mxu0 %v1435
        %1970 = vmatprep.subr.bf16.mxu0 0
        %1971 = vmatpush1.bf16.msra.mxu0 %v1438
        %1972 = vmatprep.subr.bf16.mxu0 0
        %1973 = vmatpush1.bf16.msra.mxu0 %v1441
        %1974 = vmatprep.subr.bf16.mxu0 0
        %1975 = vmatpush1.bf16.msra.mxu0 %v1444
        %1976 = vmatprep.subr.bf16.mxu0 0
        %1977 = vmatpush1.bf16.msra.mxu0 %v1447
        %1978 = vmatprep.subr.bf16.mxu0 0
        %1979 = vmatpush1.bf16.msra.mxu0 %v1450
        %1980 = vmatprep.subr.bf16.mxu0 0
        %1981 = vmatpush1.bf16.msra.mxu0 %v1453
        %1982 = vmatprep.subr.bf16.mxu0 0
        %1983 = vmatpush1.bf16.msra.mxu0 %v1456
        %1984 = vmatprep.subr.bf16.mxu0 0
        %1985 = vmatpush1.bf16.msra.mxu0 %v1459
        %1986 = vmatprep.subr.bf16.mxu0 0
        %1987 = vmatpush1.bf16.msra.mxu0 %v1462
        %1988 = vmatprep.subr.bf16.mxu0 0
        %1989 = vmatpush1.bf16.msra.mxu0 %v1465
        %1990 = vmatprep.subr.bf16.mxu0 0
        %1991 = vmatpush1.bf16.msra.mxu0 %v1468
        %1992 = vmatprep.subr.bf16.mxu0 0
        %1993 = vmatpush1.bf16.msra.mxu0 %v1471
        %1994 = vmatprep.subr.bf16.mxu0 0
        %1995 = vmatpush1.bf16.msra.mxu0 %v1474
        %1996 = vmatprep.subr.bf16.mxu0 0
        %1997 = vmatpush1.bf16.msra.mxu0 %v1477
        %1998 = vmatprep.subr.bf16.mxu0 0
        %1999 = vmatpush1.bf16.msra.mxu0 %v1480
        %2000 = vmatprep.mubr.bf16.mxu0 %v640
        %2001 = vmatmul.mubr.bf16.gmra.mrb[0].mxu0 %v639
        %v2002 = vpop.f32.mrb[0].mxu0
        %v2003 = vadd.f32 %v1962, %v2002
        %v2004 = vpop.f32.mrb[0].mxu0
        %v2005 = vpop.f32.mrb[0].mxu0
        %v2006 = vadd.f32 %v1965, %v2005
        %v2007 = vpop.f32.mrb[0].mxu0
        %2008 = vdwg.mxu0
        %v2009 = vadd.f32 %v339, %v1837
        %v2010 = vadd.f32 %v340, %v1839
        %v2011 = vadd.f32 %v341, %v2003
        %v2012 = vadd.f32 %v342, %v1841
        %v2013 = vadd.f32 %v343, %v1843
        %v2014 = vadd.f32 %v344, %v2006
        %2015 = vst [vmem:[#allocation2] sm:$0xff] %v2009
        %2016 = vst [vmem:[#allocation2 + $0x8] sm:$0xff] %v2010
        %2017 = vst [vmem:[#allocation2 + $0x10] sm:$0xff] %v2011
        %2018 = vst [vmem:[#allocation2 + $0x18] sm:$0xff] %v2012
        %2019 = vst [vmem:[#allocation2 + $0x20] sm:$0xff] %v2013
        %2020 = vst [vmem:[#allocation2 + $0x28] sm:$0xff] %v2014
        %p2021 = scmp.eq.s32.totalorder %s27, 1
        // Predicated region
        $region68: #{mos_predictor.1} parent=50 // pred_check
          %p2022 = pneg %p2021
        $region69: #{mos_predictor.1} parent=50 // pred_check_branch
          %2024 = sbr.rel (%p2022) target = $region71
        $region70: #{mos_predictor.1} parent=50 // pred_region
          %v2025 = vld [vmem:[%s277] sm:$0x3f]
          %v2026 = vld [vmem:[#allocation2] sm:$0xff]
          %v2027 = vld [vmem:[#allocation2 + $0x8] sm:$0xff]
          %v2028 = vld [vmem:[#allocation2 + $0x10] sm:$0xff]
          %v2029 = vld [vmem:[#allocation2 + $0x18] sm:$0xff]
          %v2030 = vld [vmem:[#allocation2 + $0x20] sm:$0xff]
          %v2031 = vld [vmem:[#allocation2 + $0x28] sm:$0xff]
          %v2033 = vlaneseq
          %v2034 = vshrl.u32 %v2033, 7
          %v2035 = vsub.s32 0, %v2034
          %v2036 = vrot.slane %v2025, %v2035
          %v2037 = vlaneseq
          %v2038 = vshrl.u32 %v2037, 7
          %v2039 = vsub.s32 2, %v2038
          %v2040 = vrot.slane %v2025, %v2039
          %v2041 = vlaneseq
          %v2042 = vshrl.u32 %v2041, 7
          %v2043 = vsub.s32 4, %v2042
          %v2044 = vrot.slane %v2025, %v2043
          %v2048 = vlaneseq
          %v2049 = vshrl.u32 %v2048, 7
          %v2050 = vsub.s32 0, %v2049
          %v2051 = vrot.slane %v2036, %v2050
          %v2052 = vlaneseq
          %v2053 = vshrl.u32 %v2052, 7
          %v2054 = vsub.s32 0, %v2053
          %v2055 = vrot.slane %v2040, %v2054
          %v2056 = vlaneseq
          %v2057 = vshrl.u32 %v2056, 7
          %v2058 = vsub.s32 0, %v2057
          %v2059 = vrot.slane %v2044, %v2058
          %v2060 = vadd.f32 %v2026, %v2051
          %v2061 = vadd.f32 %v2027, %v2055
          %v2062 = vadd.f32 %v2028, %v2059
          %v2063 = vadd.f32 %v2029, %v2051
          %v2064 = vadd.f32 %v2030, %v2055
          %v2065 = vadd.f32 %v2031, %v2059
          %v2066 = vtanh.pop %v2060
          %v2067 = vtanh.pop %v2061
          %v2068 = vtanh.pop %v2062
          %v2069 = vtanh.pop %v2063
          %v2070 = vtanh.pop %v2064
          %v2071 = vtanh.pop %v2065
          %v2072 = vlaneseq
          %v2073 = vshrl.u32 %v2072, 7
          %v2074 = vsub.s32 1, %v2073
          %v2075 = vrot.slane %v2025, %v2074
          %v2076 = vlaneseq
          %v2077 = vshrl.u32 %v2076, 7
          %v2078 = vsub.s32 3, %v2077
          %v2079 = vrot.slane %v2025, %v2078
          %v2080 = vlaneseq
          %v2081 = vshrl.u32 %v2080, 7
          %v2082 = vsub.s32 5, %v2081
          %v2083 = vrot.slane %v2025, %v2082
          %v2087 = vlaneseq
          %v2088 = vshrl.u32 %v2087, 7
          %v2089 = vsub.s32 1, %v2088
          %v2090 = vrot.slane %v2075, %v2089
          %v2091 = vlaneseq
          %v2092 = vshrl.u32 %v2091, 7
          %v2093 = vsub.s32 1, %v2092
          %v2094 = vrot.slane %v2079, %v2093
          %v2095 = vlaneseq
          %v2096 = vshrl.u32 %v2095, 7
          %v2097 = vsub.s32 1, %v2096
          %v2098 = vrot.slane %v2083, %v2097
          %v2099 = vmul.f32 %v2066, %v2090
          %v2100 = vmul.f32 %v2067, %v2094
          %v2101 = vmul.f32 %v2068, %v2098
          %v2102 = vmul.f32 %v2069, %v2090
          %v2103 = vmul.f32 %v2070, %v2094
          %v2104 = vmul.f32 %v2071, %v2098
          %v2105 = vadd.f32 %v2099, %v2100
          %v2106 = vadd.f32 %v2105, %v2101
          %2107 = vadd.xlane.f32.xlu0 %v2106
          %v2108 = vpop.xlane.xlu0 %2107
          %v2109 = vadd.f32 %v2102, %v2103
          %v2110 = vadd.f32 %v2109, %v2104
          %2111 = vadd.xlane.f32.xlu0 %v2110
          %v2112 = vpop.xlane.xlu0 %2111
          %vm2113 = vcmask 7168
          %2114 = vst.msk [vmem:[%s326] sm:$0xff] %vm2113, %v2108
          %2115 = vst.msk [vmem:[%s326 + $0x8] sm:$0xff] %vm2113, %v2112
        $region71: #{mos_predictor.1} parent=50 // pred_fallthru
          _
        %s2116 = smul.u32 2, %s25
        %p2117 = scmp.lt.s32.totalorder %s26, 1
        %s2118 = scalar_select %p2117, %s26, 1
        %p2119 = scmp.lt.s32.totalorder %s2116, 1
        %s2120 = scalar_select %p2119, %s2116, 1
        %s2121 = smul.addr %s2118, 2
        %s2122 = sadd.s32 %s2120, %s2121
        %s2123 = smul.addr %s2122, 8
        %s2124 = scalar_lea.vmem %s3, %s2123
        // Predicated region
        $region72: #{mos_predictor.1} parent=50 // pred_check
          %p2125 = pneg %p141
        $region73: #{mos_predictor.1} parent=50 // pred_check_branch
          %2127 = sbr.rel (%p2125) target = $region75
        $region74: #{mos_predictor.1} parent=50 // pred_region
          %s2128 = smul.u32 2, %s25
        $region75: #{mos_predictor.1} parent=50 // pred_fallthru
          _
      $region51: #{mos_predictor.1} parent=5 // pred_fallthru
        _
      %p2129 = scmp.le.s32.totalorder 2, %s15
      // Predicated region
      $region76: #{mos_predictor.1} parent=5 // pred_check
        %p2130 = pneg %p2129
      $region77: #{mos_predictor.1} parent=5 // pred_check_branch
        %2132 = sbr.rel (%p2130) target = $region79
      $region78: #{mos_predictor.1} parent=5 // pred_region
        %s2133 = ssub.s32 %s15, 2
        // Predicated region
        $region80: #{mos_predictor.1} parent=78 // pred_check
          %p2134 = pneg %p147
        $region81: #{mos_predictor.1} parent=78 // pred_check_branch
          %2136 = sbr.rel (%p2134) target = $region83
        $region82: #{mos_predictor.1} parent=78 // pred_region
          %s2137 = smul.u32 2, %s28
          %p2138 = scmp.lt.s32.totalorder %s29, 1
          %s2139 = scalar_select %p2138, %s29, 1
          %p2140 = scmp.lt.s32.totalorder %s2137, 1
          %s2141 = scalar_select %p2140, %s2137, 1
          %s2142 = smul.addr %s2139, 2
          %s2143 = sadd.s32 %s2141, %s2142
          %s2144 = smul.addr %s2143, 8
          %s2145 = scalar_lea.vmem %s3, %s2144
        $region83: #{mos_predictor.1} parent=78 // pred_fallthru
          _
      $region79: #{mos_predictor.1} parent=5 // pred_fallthru
        _
    $region6: #{mos_predictor.1} parent=1 // loop_footer
      %s19 = sadd.s32 1, %s15
    $region7: #{mos_predictor.1} parent=1 // loop_footer_branch
      %14 = sbr.rel target = $region3
    $region8: #{mos_predictor.1} parent=1 // loop_exit
      _
    %2146 = vsyncpa [#allocation5], 1
    %s2147 = scalar_lea.sflag [#allocation5], 1
    %2148 = vsyncpa %s2147, 1
    %2149 = vsyncpa [#allocation7], 1
    %s2150 = scalar_lea.sflag [#allocation7], 1
    %2151 = vsyncpa %s2150, 1

</llo_original>
